<compile_context>
chip_gen: v7x
topology: tpu7x:2x2x1
jax: 0.10.0
libtpu: 0.0.40
codegen_flags: <defaults>
</compile_context>

<pallas_src>
import functools
import math

import jax
import jax.numpy as jnp
import numpy as np
from jax.experimental import pallas as pl
from jax.experimental.pallas import tpu as pltpu


def _vmem_limit_bytes():
    """Generation-aware scoped-VMEM budget (3/4 of physical), safe fallback."""
    try:
        cap = int(pltpu.get_tpu_info().vmem_capacity_bytes)
        return max(32 * 1024 * 1024, (cap * 3) // 4)
    except Exception:
        return 48 * 1024 * 1024  # safe on v5e / v6e / v7x


_VMEM_LIMIT = _vmem_limit_bytes()


# ------------------------------ conv kernels ---------------------------------

def _block_stats(acc):
    """BN partials for one grid block: rows = [sum, sum of sq. deviations from block mean]."""
    s = jnp.sum(acc, axis=0, keepdims=True)                      # (1, C)
    d = acc - s * (1.0 / acc.shape[0])
    m2 = jnp.sum(d * d, axis=0, keepdims=True)                   # (1, C)
    return jnp.concatenate([s, m2], axis=0)                      # (2, C)  one store


def _conv1_extra_kernel(x_ref, w1_ref, we_ref, y1_ref, e_ref, s1_ref, se_ref,
                        patch_ref, *, taps, nb, nph, ho, wo, cin, center):
    """nb images: im2col gather -> one deep matmul (conv1) + centre-tap matmul (1x1 extra).

    x_ref:     (nb*NPH, PH, PW, Cin)  phase-decomposed zero-padded images (f32)
    w1_ref:    (K*Cin, Cout)          folded conv1 weights (compute dtype)
    we_ref:    (Cin, Cout)            1x1 extra weights (compute dtype)
    y1_ref:    (nb, Ho*Wo, Cout)      conv1 output (f32)
    e_ref:     (nb, Ho*Wo, Cout)      extra-branch output (f32)
    s1_ref/se_ref: (1, 2, Cout)       per-block BN partials
    patch_ref: (nb*Ho, Wo, K*Cin)     VMEM im2col scratch (compute dtype)
    """
    hw = ho * wo
    k = len(taps)
    for img in range(nb):
        for t, (p, r0, c0) in enumerate(taps):
            patch_ref[img * ho:(img + 1) * ho, :, t * cin:(t + 1) * cin] = (
                x_ref[img * nph + p, r0:r0 + ho, c0:c0 + wo, :].astype(patch_ref.dtype))
    pm = patch_ref[...].reshape(nb * hw, k * cin)
    # conv1: one MXU matmul with contraction K*Cin, f32 accumulation.
    acc1 = jnp.dot(pm, w1_ref[...], preferred_element_type=jnp.float32)
    y1_ref[...] = acc1.reshape(nb, hw, -1).astype(y1_ref.dtype)
    # extra 1x1 branch == centre tap of the already-built patch (no extra HBM read).
    acce = jnp.dot(pm[:, center * cin:(center + 1) * cin], we_ref[...],
                   preferred_element_type=jnp.float32)
    e_ref[...] = acce.reshape(nb, hw, -1).astype(e_ref.dtype)
    s1_ref[0] = _block_stats(acc1)
    se_ref[0] = _block_stats(acce)


def _conv2_kernel(x_ref, w_ref, sc_ref, sh_ref, y_ref, st_ref, patch_ref, *,
                  taps, nb, nph, ho, wo, cin):
    """conv2 with bn1 + ReLU fused into the tap gather (applied in f32, stored in compute dtype)."""
    hw = ho * wo
    k = len(taps)
    sc = sc_ref[...]                                              # (1, Cin)
    sh = sh_ref[...]
    for img in range(nb):
        for t, (p, r0, c0) in enumerate(taps):
            v = x_ref[img * nph + p, r0:r0 + ho, c0:c0 + wo, :]
            v = jnp.maximum(v * sc + sh, 0.0)                     # fused bn1 + ReLU
            patch_ref[img * ho:(img + 1) * ho, :, t * cin:(t + 1) * cin] = (
                v.astype(patch_ref.dtype))
    pm = patch_ref[...].reshape(nb * hw, k * cin)
    acc = jnp.dot(pm, w_ref[...], preferred_element_type=jnp.float32)
    y_ref[...] = acc.reshape(nb, hw, -1).astype(y_ref.dtype)
    st_ref[0] = _block_stats(acc)


# ------------------------------ conv wrappers ---------------------------------

def _make_taps(kh, kw, s):
    """(phase, row-offset, col-offset) per tap under the stride-s phase decomposition."""
    taps = [((i % s) * s + (j % s) if s > 1 else 0, i // s, j // s)
            for i in range(kh) for j in range(kw)]
    used = sorted({p for p, _, _ in taps})
    remap = {p: i for i, p in enumerate(used)}
    return tuple((remap[p], r, c) for p, r, c in taps), used


def _pad_and_split(x, pad, s, fill=None):
    """Pad an NHWC image (optionally with a per-channel fill) and phase-split by stride s."""
    N, H, W, C = x.shape
    Hp, Wp = H + 2 * pad, W + 2 * pad
    Hq = -(-Hp // s) * s
    Wq = -(-Wp // s) * s
    if fill is None:
        xq = jnp.pad(x, ((0, 0), (pad, Hq - H - pad), (pad, Wq - W - pad), (0, 0)))
    else:
        xq = jnp.broadcast_to(fill.astype(x.dtype), (N, Hq, Wq, C))
        xq = jax.lax.dynamic_update_slice(xq, x, (0, pad, pad, 0))
    if s == 1:
        return xq.reshape(N, 1, Hq, Wq, C), Hq, Wq
    ph = xq.reshape(N, Hq // s, s, Wq // s, s, C)
    ph = jnp.transpose(ph, (0, 2, 4, 1, 3, 5))                    # (N, s, s, Hq/s, Wq/s, C)
    return ph.reshape(N, s * s, Hq // s, Wq // s, C), Hq // s, Wq // s


def _pick_nb(n, hw, per_image_bytes):
    """Images per grid step: fill the MXU (nb*hw >= ~256) but keep >=2 grid blocks
    when n >= 2 (v7x dual-TC sharding) and stay inside the VMEM budget."""
    divs = [d for d in range(1, n + 1) if n % d == 0]
    cands = [d for d in divs if n // d >= 2] or divs
    budget = _VMEM_LIMIT // 2
    nb = 1
    for d in cands:
        if d * per_image_bytes > budget:
            break
        nb = d
        if d * hw >= 256:
            break
    return nb


def conv1_extra(x, w1_torch, we_torch, *, stride, compute_dtype=jnp.bfloat16):
    """Fused conv1 (3x3, pad=1, stride) + extra 1x1 (pad=0, same stride) branch.

    Conv biases are dropped (exactly cancelled by the training-mode BN that follows).
    Returns (y1, e) in NHWC f32 plus per-block BN partials [sum, centred-M2] for each.
    """
    N, H, W, Cin = x.shape
    Cout, _, KH, KW = w1_torch.shape
    assert (KH, KW) == (3, 3) and we_torch.shape[2:] == (1, 1)
    s, pad = stride, 1
    Ho = (H + 2 * pad - KH) // s + 1
    Wo = (W + 2 * pad - KW) // s + 1
    K = KH * KW
    taps, used = _make_taps(KH, KW, s)
    center = 1 * KW + 1        # centre tap of the 3x3 == the 1x1 branch's read

    phases, PH, PW = _pad_and_split(x, pad, s)
    if len(used) < phases.shape[1]:
        phases = phases[:, used]
    NPH = phases.shape[1]
    assert PH >= max(r for _, r, _ in taps) + Ho
    assert PW >= max(c for _, _, c in taps) + Wo
    phases = phases.reshape(N * NPH, PH, PW, Cin)

    cbytes = jnp.dtype(compute_dtype).itemsize
    per_img = (2 * NPH * PH * PW * Cin * 4            # double-buffered phases (f32)
               + Ho * Wo * K * Cin * cbytes           # im2col scratch
               + 2 * 2 * Ho * Wo * Cout * 4)          # double-buffered y1 + e outputs
    nb = _pick_nb(N, Ho * Wo, per_img)
    nblk = N // nb

    w1 = jnp.transpose(w1_torch, (2, 3, 1, 0)).reshape(K * Cin, Cout).astype(compute_dtype)
    we = we_torch.reshape(Cout, Cin).T.astype(compute_dtype)

    kern = functools.partial(_conv1_extra_kernel, taps=taps, nb=nb, nph=NPH,
                             ho=Ho, wo=Wo, cin=Cin, center=center)
    y1, e, st1, ste = pl.pallas_call(
        kern,
        out_shape=(jax.ShapeDtypeStruct((N, Ho * Wo, Cout), jnp.float32),
                   jax.ShapeDtypeStruct((N, Ho * Wo, Cout), jnp.float32),
                   jax.ShapeDtypeStruct((nblk, 2, Cout), jnp.float32),
                   jax.ShapeDtypeStruct((nblk, 2, Cout), jnp.float32)),
        grid=(nblk,),
        in_specs=[
            pl.BlockSpec((nb * NPH, PH, PW, Cin), lambda n: (n, 0, 0, 0)),
            pl.BlockSpec((K * Cin, Cout), lambda n: (0, 0)),
            pl.BlockSpec((Cin, Cout), lambda n: (0, 0)),
        ],
        out_specs=(
            pl.BlockSpec((nb, Ho * Wo, Cout), lambda n: (n, 0, 0)),
            pl.BlockSpec((nb, Ho * Wo, Cout), lambda n: (n, 0, 0)),
            pl.BlockSpec((1, 2, Cout), lambda n: (n, 0, 0)),
            pl.BlockSpec((1, 2, Cout), lambda n: (n, 0, 0)),
        ),
        scratch_shapes=[pltpu.VMEM((nb * Ho, Wo, K * Cin), compute_dtype)],
        compiler_params=pltpu.CompilerParams(
            dimension_semantics=("parallel",),
            vmem_limit_bytes=_VMEM_LIMIT),
    )(phases, w1, we)
    return (y1.reshape(N, Ho, Wo, Cout), e.reshape(N, Ho, Wo, Cout), st1, ste)


def conv2_bn1(y1, w_torch, sc1, sh1, *, stride, compute_dtype=jnp.bfloat16):
    """conv2 (3x3, pad=1, stride) with bn1 + ReLU fused into its im2col tap gather."""
    N, H, W, Cin = y1.shape
    Cout, _, KH, KW = w_torch.shape
    s, pad = stride, 1
    Ho = (H + 2 * pad - KH) // s + 1
    Wo = (W + 2 * pad - KW) // s + 1
    K = KH * KW
    taps, used = _make_taps(KH, KW, s)

    # Pad with the per-channel "BN-neutral" value so padded positions become 0
    # after the fused affine+ReLU (i.e. zero-padding of relu(bn1(y1)) is preserved).
    safe_sc = jnp.where(sc1 == 0, 1.0, sc1)
    neutral = jnp.where(sc1 == 0, 0.0, -sh1 / safe_sc)
    phases, PH, PW = _pad_and_split(y1, pad, s, fill=neutral)
    if len(used) < phases.shape[1]:
        phases = phases[:, used]
    NPH = phases.shape[1]
    assert PH >= max(r for _, r, _ in taps) + Ho
    assert PW >= max(c for _, _, c in taps) + Wo
    phases = phases.reshape(N * NPH, PH, PW, Cin)

    cbytes = jnp.dtype(compute_dtype).itemsize
    per_img = (2 * NPH * PH * PW * Cin * 4
               + Ho * Wo * K * Cin * cbytes
               + 2 * Ho * Wo * Cout * 4)
    nb = _pick_nb(N, Ho * Wo, per_img)
    nblk = N // nb

    w = jnp.transpose(w_torch, (2, 3, 1, 0)).reshape(K * Cin, Cout).astype(compute_dtype)
    sc = sc1.reshape(1, Cin).astype(jnp.float32)
    sh = sh1.reshape(1, Cin).astype(jnp.float32)

    kern = functools.partial(_conv2_kernel, taps=taps, nb=nb, nph=NPH,
                             ho=Ho, wo=Wo, cin=Cin)
    y2, st2 = pl.pallas_call(
        kern,
        out_shape=(jax.ShapeDtypeStruct((N, Ho * Wo, Cout), jnp.float32),
                   jax.ShapeDtypeStruct((nblk, 2, Cout), jnp.float32)),
        grid=(nblk,),
        in_specs=[
            pl.BlockSpec((nb * NPH, PH, PW, Cin), lambda n: (n, 0, 0, 0)),
            pl.BlockSpec((K * Cin, Cout), lambda n: (0, 0)),
            pl.BlockSpec((1, Cin), lambda n: (0, 0)),
            pl.BlockSpec((1, Cin), lambda n: (0, 0)),
        ],
        out_specs=(
            pl.BlockSpec((nb, Ho * Wo, Cout), lambda n: (n, 0, 0)),
            pl.BlockSpec((1, 2, Cout), lambda n: (n, 0, 0)),
        ),
        scratch_shapes=[pltpu.VMEM((nb * Ho, Wo, K * Cin), compute_dtype)],
        compiler_params=pltpu.CompilerParams(
            dimension_semantics=("parallel",),
            vmem_limit_bytes=_VMEM_LIMIT),
    )(phases, w, sc, sh)
    return y2.reshape(N, Ho, Wo, Cout), st2


# --------------------- batchnorm folding + fused residual ---------------------

def _bn_scale_shift(stats, gamma, beta, count_per_block, eps=1e-5):
    """Combine per-block [sum, centred-M2] partials (Chan et al.) into scale/shift."""
    s = stats[:, 0, :]                                  # (B, C)
    m2 = stats[:, 1, :]
    n = count_per_block * stats.shape[0]
    mean_b = s / count_per_block
    mean = jnp.sum(s, axis=0) / n
    m2_tot = jnp.sum(m2, axis=0) + count_per_block * jnp.sum((mean_b - mean) ** 2, axis=0)
    var = jnp.maximum(m2_tot / n, 0.0)                  # biased (training mode)
    inv = jax.lax.rsqrt(var + eps)
    scale = gamma * inv
    shift = beta - mean * scale
    return scale, shift


def _lane_view(m, c):
    """Pick a lane-dense 2D view (rows, lane) with lane a multiple of 128 when possible."""
    lane = 128 * c // math.gcd(128, c)                  # lcm(128, c)
    if (m * c) % lane == 0:
        return (m * c) // lane, lane, lane // c
    return m, c, 1                                      # fallback: masked stores


def _row_tile(rows, lane, itembytes=4):
    """Largest row tile dividing `rows` under a ~1.5-4 MiB byte budget (never whole-array OOM)."""
    target = max(lane * itembytes, min(4 * 1024 * 1024, _VMEM_LIMIT // 32))
    cap = max(1, target // (lane * itembytes))
    if rows <= cap:
        return rows
    t = (cap // 8) * 8
    while t >= 8:
        if rows % t == 0:
            return t
        t -= 8
    for t in range(min(cap, rows), 0, -1):
        if rows % t == 0:
            return t
    return 1


def _residual_bn_relu_kernel(y_ref, e_ref, scy_ref, shy_ref, sce_ref, she_ref,
                             o_ref):
    v = (y_ref[...] * scy_ref[...] + shy_ref[...]
         + e_ref[...] * sce_ref[...] + she_ref[...])
    o_ref[...] = jnp.maximum(v, 0.0)


def residual_bn_relu(y, e, sc_y, sh_y, sc_e, sh_e):
    """relu( bn2(y) + bne(e) ) fused into one tiled, lane-dense elementwise pass."""
    assert y.shape == e.shape
    c = y.shape[-1]
    m = y.size // c
    rows, lane, reps = _lane_view(m, c)
    tr = _row_tile(rows, lane)
    yv = y.reshape(rows, lane)
    ev = e.reshape(rows, lane)
    scy = jnp.tile(sc_y, reps).reshape(1, lane)
    shy = jnp.tile(sh_y, reps).reshape(1, lane)
    sce = jnp.tile(sc_e, reps).reshape(1, lane)
    she = jnp.tile(sh_e, reps).reshape(1, lane)
    out = pl.pallas_call(
        _residual_bn_relu_kernel,
        out_shape=jax.ShapeDtypeStruct((rows, lane), jnp.float32),
        grid=(rows // tr,),
        in_specs=[pl.BlockSpec((tr, lane), lambda i: (i, 0)),
                  pl.BlockSpec((tr, lane), lambda i: (i, 0)),
                  pl.BlockSpec((1, lane), lambda i: (0, 0)),
                  pl.BlockSpec((1, lane), lambda i: (0, 0)),
                  pl.BlockSpec((1, lane), lambda i: (0, 0)),
                  pl.BlockSpec((1, lane), lambda i: (0, 0))],
        out_specs=pl.BlockSpec((tr, lane), lambda i: (i, 0)),
        compiler_params=pltpu.CompilerParams(
            dimension_semantics=("parallel",),
            vmem_limit_bytes=_VMEM_LIMIT),
    )(yv, ev, scy, shy, sce, she)
    return out.reshape(y.shape)


# ------------------------------ module glue ---------------------------------

def init_params(key, in_channels, out_channels):
    ks = jax.random.split(key, 6)
    return {
        "conv1_w": 0.1 * jax.random.normal(ks[0], (out_channels, in_channels, 3, 3), jnp.float32),
        "conv1_b": 0.05 * jax.random.normal(ks[1], (out_channels,), jnp.float32),
        "conv2_w": 0.1 * jax.random.normal(ks[2], (out_channels, out_channels, 3, 3), jnp.float32),
        "conv2_b": 0.05 * jax.random.normal(ks[3], (out_channels,), jnp.float32),
        "extra_w": 0.1 * jax.random.normal(ks[4], (out_channels, in_channels, 1, 1), jnp.float32),
        "extra_b": 0.05 * jax.random.normal(ks[5], (out_channels,), jnp.float32),
        # BatchNorm2d default init (weight=1, bias=0).
        "bn1_g": jnp.ones((out_channels,), jnp.float32),
        "bn1_b": jnp.zeros((out_channels,), jnp.float32),
        "bn2_g": jnp.ones((out_channels,), jnp.float32),
        "bn2_b": jnp.zeros((out_channels,), jnp.float32),
        "bne_g": jnp.ones((out_channels,), jnp.float32),
        "bne_b": jnp.zeros((out_channels,), jnp.float32),
    }


def resnet_down_block(x_nchw, p, stride, compute_dtype=jnp.bfloat16):
    """Forward of ResnetdownBlock. Input/output in NCHW (PyTorch convention).

    Conv biases are intentionally omitted in the kernels: training-mode
    BatchNorm subtracts the batch mean, so a per-channel bias right before BN
    is a mathematical no-op (the pure-JAX reference keeps the biases and
    matches).  Not valid for eval-mode (running-stat) BN.
    """
    s0, s1 = stride
    x = jnp.transpose(x_nchw, (0, 2, 3, 1)).astype(jnp.float32)   # NCHW -> NHWC

    # Fused conv1 (3x3, pad=1) + extra 1x1 branch: x is read from HBM once.
    y1, e, st1, ste = conv1_extra(x, p["conv1_w"], p["extra_w"], stride=s0,
                                  compute_dtype=compute_dtype)
    n1, ho1, wo1, _ = y1.shape
    cnt1 = (n1 // st1.shape[0]) * ho1 * wo1
    sc1, sh1 = _bn_scale_shift(st1, p["bn1_g"], p["bn1_b"], cnt1)
    sce, she = _bn_scale_shift(ste, p["bne_g"], p["bne_b"], cnt1)

    # conv2 with bn1 + ReLU fused into its tap gather (no standalone BN pass).
    y2, st2 = conv2_bn1(y1, p["conv2_w"], sc1, sh1, stride=s1,
                        compute_dtype=compute_dtype)
    n2, ho2, wo2, _ = y2.shape
    cnt2 = (n2 // st2.shape[0]) * ho2 * wo2
    sc2, sh2 = _bn_scale_shift(st2, p["bn2_g"], p["bn2_b"], cnt2)

    out = residual_bn_relu(y2, e, sc2, sh2, sce, she)             # bn2+bne+add+ReLU
    return jnp.transpose(out, (0, 3, 1, 2))                       # NHWC -> NCHW


# ----------------------- pure-JAX reference (check) --------------------------

def _ref_forward(x_nchw, p, stride, eps=1e-5):
    def conv(x, w, b, s, pad):
        y = jax.lax.conv_general_dilated(
            x, w, window_strides=(s, s), padding=[(pad, pad), (pad, pad)],
            dimension_numbers=("NCHW", "OIHW", "NCHW"))
        return y + b[None, :, None, None]

    def bn(x, g, bt):
        mean = jnp.mean(x, axis=(0, 2, 3), keepdims=True)
        var = jnp.mean((x - mean) ** 2, axis=(0, 2, 3), keepdims=True)
        return (x - mean) * jax.lax.rsqrt(var + eps) * g[None, :, None, None] \
            + bt[None, :, None, None]

    s0, s1 = stride
    ex = bn(conv(x_nchw, p["extra_w"], p["extra_b"], s0, 0), p["bne_g"], p["bne_b"])
    y = jax.nn.relu(bn(conv(x_nchw, p["conv1_w"], p["conv1_b"], s0, 1),
                       p["bn1_g"], p["bn1_b"]))
    y = bn(conv(y, p["conv2_w"], p["conv2_b"], s1, 1), p["bn2_g"], p["bn2_b"])
    return jax.nn.relu(ex + y)


if __name__ == "__main__":
    key = jax.random.PRNGKey(0)
    kx, kp = jax.random.split(key)

    N, Cin, H, W = 2, 4, 16, 16
    Cout = 8
    stride = (2, 1)   # ResNet down block: first conv downsamples

    x = jax.random.normal(kx, (N, Cin, H, W), jnp.float32)
    params = init_params(kp, Cin, Cout)
    ref = _ref_forward(x, params, stride)

    # f32 operand path: PyTorch-equivalent numerics (conv biases dropped in the
    # kernels are exactly cancelled by the training-mode BN kept in the reference).
    out_f32 = jax.block_until_ready(
        resnet_down_block(x, params, stride, compute_dtype=jnp.float32))
    assert out_f32.shape == (N, Cout, H // stride[0], W // stride[0]), out_f32.shape
    np.testing.assert_allclose(np.asarray(out_f32), np.asarray(ref),
                               rtol=3e-4, atol=3e-4)

    # Default bf16 MXU-operand path (f32 accumulation) — production setting.
    out_bf16 = jax.block_until_ready(resnet_down_block(x, params, stride))
    np.testing.assert_allclose(np.asarray(out_bf16), np.asarray(ref),
                               rtol=1e-1, atol=1e-1)

    print("KERNEL_OK")
</pallas_src>

<mosaic_0001>
module attributes {stable_mosaic.version = 11 : i64} {
  func.func @_conv1_extra_kernel(%arg0: i32, %arg1: memref<4x9x9x4xf32, #tpu.memory_space<vmem>>, %arg2: memref<36x8xf32, #tpu.memory_space<vmem>>, %arg3: memref<4x8xf32, #tpu.memory_space<vmem>>, %arg4: memref<1x64x8xf32, #tpu.memory_space<vmem>>, %arg5: memref<1x64x8xf32, #tpu.memory_space<vmem>>, %arg6: memref<1x2x8xf32, #tpu.memory_space<vmem>>, %arg7: memref<1x2x8xf32, #tpu.memory_space<vmem>>, %arg8: memref<8x8x36xf32, #tpu.memory_space<vmem>>) attributes {dimension_semantics = [#tpu.dimension_semantics<parallel>], iteration_bounds = array<i64: 2>, scalar_prefetch = 0 : i64, scratch_operands = 1 : i64, tpu.core_type = #tpu.core_type<tc>, window_params = [{transform_indices = @transform_0, window_bounds = array<i64: 4, 9, 9, 4>}, {pipeline_mode = #tpu.pipeline_mode<synchronous>, transform_indices = @transform_1, window_bounds = array<i64: 36, 8>}, {pipeline_mode = #tpu.pipeline_mode<synchronous>, transform_indices = @transform_2, window_bounds = array<i64: 4, 8>}, {transform_indices = @transform_3, window_bounds = array<i64: 1, 64, 8>}, {transform_indices = @transform_4, window_bounds = array<i64: 1, 64, 8>}, {transform_indices = @transform_5, window_bounds = array<i64: 1, 2, 8>}, {transform_indices = @transform_6, window_bounds = array<i64: 1, 2, 8>}]} {
    %c0 = arith.constant 0 : index
    %c0_0 = arith.constant 0 : index
    %c0_1 = arith.constant 0 : index
    %c0_2 = arith.constant 0 : index
    %0 = vector.load %arg1[%c0, %c0_0, %c0_1, %c0_2] : memref<4x9x9x4xf32, #tpu.memory_space<vmem>>, vector<1x8x8x4xf32>
    %1 = vector.shape_cast %0 : vector<1x8x8x4xf32> to vector<8x8x4xf32>
    %c0_3 = arith.constant 0 : index
    %c0_4 = arith.constant 0 : index
    %c0_5 = arith.constant 0 : index
    %2 = vector.load %arg8[%c0_3, %c0_4, %c0_5] : memref<8x8x36xf32, #tpu.memory_space<vmem>>, vector<8x8x4xf32>
    tpu.vector_store %arg8[%c0_3, %c0_4, %c0_5], %1 {strides = array<i32>} : memref<8x8x36xf32, #tpu.memory_space<vmem>>, vector<8x8x4xf32>,
    %c1 = arith.constant 1 : index
    %c0_6 = arith.constant 0 : index
    %c0_7 = arith.constant 0 : index
    %c0_8 = arith.constant 0 : index
    %3 = vector.load %arg1[%c1, %c0_6, %c0_7, %c0_8] : memref<4x9x9x4xf32, #tpu.memory_space<vmem>>, vector<1x8x8x4xf32>
    %4 = vector.shape_cast %3 : vector<1x8x8x4xf32> to vector<8x8x4xf32>
    %c0_9 = arith.constant 0 : index
    %c0_10 = arith.constant 0 : index
    %c4 = arith.constant 4 : index
    %5 = vector.load %arg8[%c0_9, %c0_10, %c4] : memref<8x8x36xf32, #tpu.memory_space<vmem>>, vector<8x8x4xf32>
    tpu.vector_store %arg8[%c0_9, %c0_10, %c4], %4 {strides = array<i32>} : memref<8x8x36xf32, #tpu.memory_space<vmem>>, vector<8x8x4xf32>,
    %c0_11 = arith.constant 0 : index
    %c0_12 = arith.constant 0 : index
    %c1_13 = arith.constant 1 : index
    %c0_14 = arith.constant 0 : index
    %6 = vector.load %arg1[%c0_11, %c0_12, %c1_13, %c0_14] : memref<4x9x9x4xf32, #tpu.memory_space<vmem>>, vector<1x8x8x4xf32>
    %7 = vector.shape_cast %6 : vector<1x8x8x4xf32> to vector<8x8x4xf32>
    %c0_15 = arith.constant 0 : index
    %c0_16 = arith.constant 0 : index
    %c8 = arith.constant 8 : index
    %8 = vector.load %arg8[%c0_15, %c0_16, %c8] : memref<8x8x36xf32, #tpu.memory_space<vmem>>, vector<8x8x4xf32>
    tpu.vector_store %arg8[%c0_15, %c0_16, %c8], %7 {strides = array<i32>} : memref<8x8x36xf32, #tpu.memory_space<vmem>>, vector<8x8x4xf32>,
    %c2 = arith.constant 2 : index
    %c0_17 = arith.constant 0 : index
    %c0_18 = arith.constant 0 : index
    %c0_19 = arith.constant 0 : index
    %9 = vector.load %arg1[%c2, %c0_17, %c0_18, %c0_19] : memref<4x9x9x4xf32, #tpu.memory_space<vmem>>, vector<1x8x8x4xf32>
    %10 = vector.shape_cast %9 : vector<1x8x8x4xf32> to vector<8x8x4xf32>
    %c0_20 = arith.constant 0 : index
    %c0_21 = arith.constant 0 : index
    %c12 = arith.constant 12 : index
    %11 = vector.load %arg8[%c0_20, %c0_21, %c12] : memref<8x8x36xf32, #tpu.memory_space<vmem>>, vector<8x8x4xf32>
    tpu.vector_store %arg8[%c0_20, %c0_21, %c12], %10 {strides = array<i32>} : memref<8x8x36xf32, #tpu.memory_space<vmem>>, vector<8x8x4xf32>,
    %c3 = arith.constant 3 : index
    %c0_22 = arith.constant 0 : index
    %c0_23 = arith.constant 0 : index
    %c0_24 = arith.constant 0 : index
    %12 = vector.load %arg1[%c3, %c0_22, %c0_23, %c0_24] : memref<4x9x9x4xf32, #tpu.memory_space<vmem>>, vector<1x8x8x4xf32>
    %13 = vector.shape_cast %12 : vector<1x8x8x4xf32> to vector<8x8x4xf32>
    %c0_25 = arith.constant 0 : index
    %c0_26 = arith.constant 0 : index
    %c16 = arith.constant 16 : index
    %14 = vector.load %arg8[%c0_25, %c0_26, %c16] : memref<8x8x36xf32, #tpu.memory_space<vmem>>, vector<8x8x4xf32>
    tpu.vector_store %arg8[%c0_25, %c0_26, %c16], %13 {strides = array<i32>} : memref<8x8x36xf32, #tpu.memory_space<vmem>>, vector<8x8x4xf32>,
    %c2_27 = arith.constant 2 : index
    %c0_28 = arith.constant 0 : index
    %c1_29 = arith.constant 1 : index
    %c0_30 = arith.constant 0 : index
    %15 = vector.load %arg1[%c2_27, %c0_28, %c1_29, %c0_30] : memref<4x9x9x4xf32, #tpu.memory_space<vmem>>, vector<1x8x8x4xf32>
    %16 = vector.shape_cast %15 : vector<1x8x8x4xf32> to vector<8x8x4xf32>
    %c0_31 = arith.constant 0 : index
    %c0_32 = arith.constant 0 : index
    %c20 = arith.constant 20 : index
    %17 = vector.load %arg8[%c0_31, %c0_32, %c20] : memref<8x8x36xf32, #tpu.memory_space<vmem>>, vector<8x8x4xf32>
    tpu.vector_store %arg8[%c0_31, %c0_32, %c20], %16 {strides = array<i32>} : memref<8x8x36xf32, #tpu.memory_space<vmem>>, vector<8x8x4xf32>,
    %c0_33 = arith.constant 0 : index
    %c1_34 = arith.constant 1 : index
    %c0_35 = arith.constant 0 : index
    %c0_36 = arith.constant 0 : index
    %18 = vector.load %arg1[%c0_33, %c1_34, %c0_35, %c0_36] : memref<4x9x9x4xf32, #tpu.memory_space<vmem>>, vector<1x8x8x4xf32>
    %19 = vector.shape_cast %18 : vector<1x8x8x4xf32> to vector<8x8x4xf32>
    %c0_37 = arith.constant 0 : index
    %c0_38 = arith.constant 0 : index
    %c24 = arith.constant 24 : index
    %20 = vector.load %arg8[%c0_37, %c0_38, %c24] : memref<8x8x36xf32, #tpu.memory_space<vmem>>, vector<8x8x4xf32>
    tpu.vector_store %arg8[%c0_37, %c0_38, %c24], %19 {strides = array<i32>} : memref<8x8x36xf32, #tpu.memory_space<vmem>>, vector<8x8x4xf32>,
    %c1_39 = arith.constant 1 : index
    %c1_40 = arith.constant 1 : index
    %c0_41 = arith.constant 0 : index
    %c0_42 = arith.constant 0 : index
    %21 = vector.load %arg1[%c1_39, %c1_40, %c0_41, %c0_42] : memref<4x9x9x4xf32, #tpu.memory_space<vmem>>, vector<1x8x8x4xf32>
    %22 = vector.shape_cast %21 : vector<1x8x8x4xf32> to vector<8x8x4xf32>
    %c0_43 = arith.constant 0 : index
    %c0_44 = arith.constant 0 : index
    %c28 = arith.constant 28 : index
    %23 = vector.load %arg8[%c0_43, %c0_44, %c28] : memref<8x8x36xf32, #tpu.memory_space<vmem>>, vector<8x8x4xf32>
    tpu.vector_store %arg8[%c0_43, %c0_44, %c28], %22 {strides = array<i32>} : memref<8x8x36xf32, #tpu.memory_space<vmem>>, vector<8x8x4xf32>,
    %c0_45 = arith.constant 0 : index
    %c1_46 = arith.constant 1 : index
    %c1_47 = arith.constant 1 : index
    %c0_48 = arith.constant 0 : index
    %24 = vector.load %arg1[%c0_45, %c1_46, %c1_47, %c0_48] : memref<4x9x9x4xf32, #tpu.memory_space<vmem>>, vector<1x8x8x4xf32>
    %25 = vector.shape_cast %24 : vector<1x8x8x4xf32> to vector<8x8x4xf32>
    %c0_49 = arith.constant 0 : index
    %c0_50 = arith.constant 0 : index
    %c32 = arith.constant 32 : index
    %26 = vector.load %arg8[%c0_49, %c0_50, %c32] : memref<8x8x36xf32, #tpu.memory_space<vmem>>, vector<8x8x4xf32>
    tpu.vector_store %arg8[%c0_49, %c0_50, %c32], %25 {strides = array<i32>} : memref<8x8x36xf32, #tpu.memory_space<vmem>>, vector<8x8x4xf32>,
    %c0_51 = arith.constant 0 : index
    %c0_52 = arith.constant 0 : index
    %c0_53 = arith.constant 0 : index
    %27 = vector.load %arg8[%c0_51, %c0_52, %c0_53] : memref<8x8x36xf32, #tpu.memory_space<vmem>>, vector<8x8x36xf32>
    %28 = vector.shape_cast %27 : vector<8x8x36xf32> to vector<64x36xf32>
    %c0_54 = arith.constant 0 : index
    %c0_55 = arith.constant 0 : index
    %29 = vector.load %arg2[%c0_54, %c0_55] : memref<36x8xf32, #tpu.memory_space<vmem>>, vector<36x8xf32>
    %cst = arith.constant dense<0.000000e+00> : vector<64x8xf32>
    %30 = tpu.matmul %28, %29, %cst {dimension_numbers = #tpu.dot_dimension_numbers<[1], [0], [0], [1], [0, 0, 1, 1], [], []>} : vector<64x36xf32>, vector<36x8xf32>, vector<64x8xf32> -> vector<64x8xf32>
    %31 = vector.shape_cast %30 : vector<64x8xf32> to vector<1x64x8xf32>
    %c0_56 = arith.constant 0 : index
    %c0_57 = arith.constant 0 : index
    %c0_58 = arith.constant 0 : index
    %32 = vector.load %arg4[%c0_56, %c0_57, %c0_58] : memref<1x64x8xf32, #tpu.memory_space<vmem>>, vector<1x64x8xf32>
    tpu.vector_store %arg4[%c0_56, %c0_57, %c0_58], %31 {strides = array<i32>} : memref<1x64x8xf32, #tpu.memory_space<vmem>>, vector<1x64x8xf32>,
    %33 = vector.extract_strided_slice %28 {offsets = [0, 16], sizes = [64, 4], strides = [1, 1]} : vector<64x36xf32> to vector<64x4xf32>
    %c0_59 = arith.constant 0 : index
    %c0_60 = arith.constant 0 : index
    %34 = vector.load %arg3[%c0_59, %c0_60] : memref<4x8xf32, #tpu.memory_space<vmem>>, vector<4x8xf32>
    %cst_61 = arith.constant dense<0.000000e+00> : vector<64x8xf32>
    %35 = tpu.matmul %33, %34, %cst_61 {dimension_numbers = #tpu.dot_dimension_numbers<[1], [0], [0], [1], [0, 0, 1, 1], [], []>} : vector<64x4xf32>, vector<4x8xf32>, vector<64x8xf32> -> vector<64x8xf32>
    %36 = vector.shape_cast %35 : vector<64x8xf32> to vector<1x64x8xf32>
    %c0_62 = arith.constant 0 : index
    %c0_63 = arith.constant 0 : index
    %c0_64 = arith.constant 0 : index
    %37 = vector.load %arg5[%c0_62, %c0_63, %c0_64] : memref<1x64x8xf32, #tpu.memory_space<vmem>>, vector<1x64x8xf32>
    tpu.vector_store %arg5[%c0_62, %c0_63, %c0_64], %36 {strides = array<i32>} : memref<1x64x8xf32, #tpu.memory_space<vmem>>, vector<1x64x8xf32>,
    %cst_65 = arith.constant dense<0.000000e+00> : vector<8xf32>
    %38 = vector.multi_reduction <add>, %30, %cst_65 [0] : vector<64x8xf32> to vector<8xf32>
    %39 = vector.shape_cast %38 : vector<8xf32> to vector<1x8xf32>
    %cst_66 = arith.constant 1.562500e-02 : f32
    %40 = vector.broadcast %cst_66 : f32 to vector<1x8xf32>
    %41 = arith.mulf %39, %40 : vector<1x8xf32>
    %42 = vector.broadcast %41 : vector<1x8xf32> to vector<64x8xf32>
    %43 = arith.subf %30, %42 : vector<64x8xf32>
    %44 = arith.mulf %43, %43 : vector<64x8xf32>
    %cst_67 = arith.constant dense<0.000000e+00> : vector<8xf32>
    %45 = vector.multi_reduction <add>, %44, %cst_67 [0] : vector<64x8xf32> to vector<8xf32>
    %46 = vector.shape_cast %45 : vector<8xf32> to vector<1x8xf32>
    %47 = tpu.concatenate %39, %46 in 0 : vector<1x8xf32>, vector<1x8xf32> -> vector<2x8xf32>
    %c0_68 = arith.constant 0 : index
    %c0_69 = arith.constant 0 : index
    %c0_70 = arith.constant 0 : index
    %48 = vector.load %arg6[%c0_68, %c0_69, %c0_70] : memref<1x2x8xf32, #tpu.memory_space<vmem>>, vector<1x2x8xf32>
    %49 = vector.shape_cast %48 : vector<1x2x8xf32> to vector<2x8xf32>
    %50 = vector.shape_cast %47 : vector<2x8xf32> to vector<1x2x8xf32>
    tpu.vector_store %arg6[%c0_68, %c0_69, %c0_70], %50 {strides = array<i32>} : memref<1x2x8xf32, #tpu.memory_space<vmem>>, vector<1x2x8xf32>,
    %cst_71 = arith.constant dense<0.000000e+00> : vector<8xf32>
    %51 = vector.multi_reduction <add>, %35, %cst_71 [0] : vector<64x8xf32> to vector<8xf32>
    %52 = vector.shape_cast %51 : vector<8xf32> to vector<1x8xf32>
    %cst_72 = arith.constant 1.562500e-02 : f32
    %53 = vector.broadcast %cst_72 : f32 to vector<1x8xf32>
    %54 = arith.mulf %52, %53 : vector<1x8xf32>
    %55 = vector.broadcast %54 : vector<1x8xf32> to vector<64x8xf32>
    %56 = arith.subf %35, %55 : vector<64x8xf32>
    %57 = arith.mulf %56, %56 : vector<64x8xf32>
    %cst_73 = arith.constant dense<0.000000e+00> : vector<8xf32>
    %58 = vector.multi_reduction <add>, %57, %cst_73 [0] : vector<64x8xf32> to vector<8xf32>
    %59 = vector.shape_cast %58 : vector<8xf32> to vector<1x8xf32>
    %60 = tpu.concatenate %52, %59 in 0 : vector<1x8xf32>, vector<1x8xf32> -> vector<2x8xf32>
    %c0_74 = arith.constant 0 : index
    %c0_75 = arith.constant 0 : index
    %c0_76 = arith.constant 0 : index
    %61 = vector.load %arg7[%c0_74, %c0_75, %c0_76] : memref<1x2x8xf32, #tpu.memory_space<vmem>>, vector<1x2x8xf32>
    %62 = vector.shape_cast %61 : vector<1x2x8xf32> to vector<2x8xf32>
    %63 = vector.shape_cast %60 : vector<2x8xf32> to vector<1x2x8xf32>
    tpu.vector_store %arg7[%c0_74, %c0_75, %c0_76], %63 {strides = array<i32>} : memref<1x2x8xf32, #tpu.memory_space<vmem>>, vector<1x2x8xf32>,
    return
  }
  func.func @transform_0(%arg0: i32) -> (i32, i32, i32, i32) {
    %c0_i32 = arith.constant 0 : i32
    %c0_i32_0 = arith.constant 0 : i32
    %c0_i32_1 = arith.constant 0 : i32
    %c0_i32_2 = arith.constant 0 : i32
    return %arg0, %c0_i32, %c0_i32_0, %c0_i32_1 : i32, i32, i32, i32
  }
  func.func @transform_1(%arg0: i32) -> (i32, i32) {
    %c0_i32 = arith.constant 0 : i32
    %c0_i32_0 = arith.constant 0 : i32
    %c0_i32_1 = arith.constant 0 : i32
    return %c0_i32, %c0_i32_0 : i32, i32
  }
  func.func @transform_2(%arg0: i32) -> (i32, i32) {
    %c0_i32 = arith.constant 0 : i32
    %c0_i32_0 = arith.constant 0 : i32
    %c0_i32_1 = arith.constant 0 : i32
    return %c0_i32, %c0_i32_0 : i32, i32
  }
  func.func @transform_3(%arg0: i32) -> (i32, i32, i32) {
    %c0_i32 = arith.constant 0 : i32
    %c0_i32_0 = arith.constant 0 : i32
    %c0_i32_1 = arith.constant 0 : i32
    return %arg0, %c0_i32, %c0_i32_0 : i32, i32, i32
  }
  func.func @transform_4(%arg0: i32) -> (i32, i32, i32) {
    %c0_i32 = arith.constant 0 : i32
    %c0_i32_0 = arith.constant 0 : i32
    %c0_i32_1 = arith.constant 0 : i32
    return %arg0, %c0_i32, %c0_i32_0 : i32, i32, i32
  }
  func.func @transform_5(%arg0: i32) -> (i32, i32, i32) {
    %c0_i32 = arith.constant 0 : i32
    %c0_i32_0 = arith.constant 0 : i32
    %c0_i32_1 = arith.constant 0 : i32
    return %arg0, %c0_i32, %c0_i32_0 : i32, i32, i32
  }
  func.func @transform_6(%arg0: i32) -> (i32, i32, i32) {
    %c0_i32 = arith.constant 0 : i32
    %c0_i32_0 = arith.constant 0 : i32
    %c0_i32_1 = arith.constant 0 : i32
    return %arg0, %c0_i32, %c0_i32_0 : i32, i32, i32
  }
}

</mosaic_0001>

<llo_original>
// kernel: tpu_custom_call.1
$region0: #{tpu_custom_call.1}
  #allocation0 [shape = 'u32[]', space=smem, size = 0x4, offset = 0x4, fixed_abs, tag = 'smem constant byte address 0x4 - core index']
  #allocation1 [shape = 'u32[144,128]{1,0:T(1,128)}', space=vmem, size = 0x12000, scoped, tag = 'internal scratch']
  #allocation2 [shape = 'f32[8,8,36]{2,1,0:T(8,128)}', space=vmem, size = 0x8000, scoped, tag = 'scratch operand']
  %s0 = inlined_call_operand.vmem [shape: f32[8,9,9,4], index: 0, kind: input, shape index: {}]
  %s1 = inlined_call_operand.vmem [shape: f32[36,8], index: 1, kind: input, shape index: {}]
  %s2 = inlined_call_operand.vmem [shape: f32[4,8], index: 2, kind: input, shape index: {}]
  %s3 = inlined_call_operand.vmem [shape: f32[2,64,8], index: 3, kind: output, shape index: {0}]
  %s4 = inlined_call_operand.vmem [shape: f32[2,64,8], index: 4, kind: output, shape index: {1}]
  %s5 = inlined_call_operand.hbm [shape: f32[2,2,8], index: 5, kind: output, shape index: {2}]
  %s6 = inlined_call_operand.hbm [shape: f32[2,2,8], index: 6, kind: output, shape index: {3}]
  %7 = xla_tuple %s3, %s4, %s5, %s6
  %s8 = sld [smem:[#allocation0]]
  $region69: #{tpu_custom_call.1} parent=0
    _
  %s10 = ssub.s32 1, %s8
  %s11 = scalar_select 0, %s10, %s8
  $region1: #{tpu_custom_call.1} parent=0
    #allocation3 [shape = 'u8[2048]{0}', space=vmem, size = 0x800, scoped, tag = 'output window, operand 2']
    #allocation4 [shape = 's32[2]{0}', space=sflag, size = 0x8, scoped, tag = 'scoped memory for tpu_custom_call.1']
    #allocation5 [shape = 'u8[2048]{0}', space=vmem, size = 0x800, scoped, tag = 'output window, operand 3']
    #allocation6 [shape = 's32[2]{0}', space=sflag, size = 0x8, scoped, tag = 'scoped memory for tpu_custom_call.1']
    %12 = vsyncpa [#allocation4], 0
    %s13 = scalar_lea.sflag [#allocation4], 1
    %14 = vsyncpa %s13, 0
    %15 = vsyncpa [#allocation6], 0
    %s16 = scalar_lea.sflag [#allocation6], 1
    %17 = vsyncpa %s16, 0
    loop: start=0, step=1, limit=4
    $region2: #{tpu_custom_call.1} parent=1 // loop_pre_header
      _
    $region3: #{tpu_custom_call.1} parent=1 // loop_header
      %s19 = sphi 0, %s23
      %p20 = scmp.ge.s32.totalorder %s19, 4
      %s29 = sphi 0, %s31
      %s32 = sphi 0, %s29
      %s33 = sphi 0, %s32
      %s49 = sphi 0, %s33
      %s53 = sphi 0, %s53
      %s55 = sphi 0, %s53
      %s56 = sphi 0, %s55
      %s70 = sphi 0, %s56
      %s74 = sphi 0, %s74
      %s76 = sphi 0, %s74
      %s77 = sphi 0, %s76
      %s91 = sphi 0, %s77
      %s97 = sphi 0, %s99
      %s100 = sphi 0, %s97
      %s101 = sphi 0, %s100
      %s117 = sphi 0, %s101
      %s123 = sphi 0, %s125
      %s126 = sphi 0, %s123
      %s127 = sphi 0, %s126
      %s143 = sphi 0, %s127
      %s149 = sphi 0, %s151
      %s152 = sphi 0, %s149
      %s153 = sphi 0, %s152
      %s169 = sphi 0, %s153
      %s175 = sphi 0, %s177
      %s178 = sphi 0, %s175
      %s179 = sphi 0, %s178
      %s195 = sphi 0, %s179
    $region4: #{tpu_custom_call.1} parent=1 // loop_header_branch
      %22 = sbr.rel (%p20) target = $region8
    $region5: #{tpu_custom_call.1} parent=1 // loop_body
      %s24 = ssub.s32 %s19, 1
      %s25 = ssub.s32 %s19, 2
      %s26 = sadd.s32 %s19, 1
      %s27 = ssub.s32 %s19, %s26
      %p28 = scmp.eq.s32.totalorder %s27, 0
      %s30 = sadd.s32 %s29, 1
      %s31 = scalar_select %p28, %s29, %s30
      %p34 = pneg %p28
      %p35 = scmp.eq.s32.totalorder %s19, 1
      %p36 = por %p34, %p35
      %p37 = scmp.ne.s32.totalorder %s29, %s32
      %p38 = scmp.eq.s32.totalorder %s19, 0
      %p39 = por %p37, %p38
      %p40 = scmp.ne.s32.totalorder %s29, %s32
      %p41 = scmp.eq.s32.totalorder %s24, 1
      %p42 = por %p40, %p41
      %p43 = scmp.ne.s32.totalorder %s32, %s33
      %p44 = scmp.eq.s32.totalorder %s24, 0
      %p45 = por %p43, %p44
      %p46 = scmp.ne.s32.totalorder %s32, %s33
      %p47 = scmp.eq.s32.totalorder %s25, 1
      %p48 = por %p46, %p47
      %p50 = scmp.ne.s32.totalorder %s33, %s49
      %p51 = scmp.eq.s32.totalorder %s25, 0
      %p52 = por %p50, %p51
      %s54 = sadd.s32 %s53, 1
      %p57 = scmp.eq.s32.totalorder %s19, 1
      %p58 = scmp.ne.s32.totalorder %s53, %s55
      %p59 = scmp.eq.s32.totalorder %s19, 0
      %p60 = por %p58, %p59
      %p61 = scmp.ne.s32.totalorder %s53, %s55
      %p62 = scmp.eq.s32.totalorder %s24, 1
      %p63 = por %p61, %p62
      %p64 = scmp.ne.s32.totalorder %s55, %s56
      %p65 = scmp.eq.s32.totalorder %s24, 0
      %p66 = por %p64, %p65
      %p67 = scmp.ne.s32.totalorder %s55, %s56
      %p68 = scmp.eq.s32.totalorder %s25, 1
      %p69 = por %p67, %p68
      %p71 = scmp.ne.s32.totalorder %s56, %s70
      %p72 = scmp.eq.s32.totalorder %s25, 0
      %p73 = por %p71, %p72
      %s75 = sadd.s32 %s74, 1
      %p78 = scmp.eq.s32.totalorder %s19, 1
      %p79 = scmp.ne.s32.totalorder %s74, %s76
      %p80 = scmp.eq.s32.totalorder %s19, 0
      %p81 = por %p79, %p80
      %p82 = scmp.ne.s32.totalorder %s74, %s76
      %p83 = scmp.eq.s32.totalorder %s24, 1
      %p84 = por %p82, %p83
      %p85 = scmp.ne.s32.totalorder %s76, %s77
      %p86 = scmp.eq.s32.totalorder %s24, 0
      %p87 = por %p85, %p86
      %p88 = scmp.ne.s32.totalorder %s76, %s77
      %p89 = scmp.eq.s32.totalorder %s25, 1
      %p90 = por %p88, %p89
      %p92 = scmp.ne.s32.totalorder %s77, %s91
      %p93 = scmp.eq.s32.totalorder %s25, 0
      %p94 = por %p92, %p93
      %s95 = ssub.s32 %s19, %s26
      %p96 = scmp.eq.s32.totalorder %s95, 0
      %s98 = sadd.s32 %s97, 1
      %s99 = scalar_select %p96, %s97, %s98
      %p102 = pneg %p96
      %p103 = scmp.eq.s32.totalorder %s19, 1
      %p104 = por %p102, %p103
      %p105 = scmp.ne.s32.totalorder %s97, %s100
      %p106 = scmp.eq.s32.totalorder %s19, 0
      %p107 = por %p105, %p106
      %p108 = scmp.ne.s32.totalorder %s97, %s100
      %p109 = scmp.eq.s32.totalorder %s24, 1
      %p110 = por %p108, %p109
      %p111 = scmp.ne.s32.totalorder %s100, %s101
      %p112 = scmp.eq.s32.totalorder %s24, 0
      %p113 = por %p111, %p112
      %p114 = scmp.ne.s32.totalorder %s100, %s101
      %p115 = scmp.eq.s32.totalorder %s25, 1
      %p116 = por %p114, %p115
      %p118 = scmp.ne.s32.totalorder %s101, %s117
      %p119 = scmp.eq.s32.totalorder %s25, 0
      %p120 = por %p118, %p119
      %s121 = ssub.s32 %s19, %s26
      %p122 = scmp.eq.s32.totalorder %s121, 0
      %s124 = sadd.s32 %s123, 1
      %s125 = scalar_select %p122, %s123, %s124
      %p128 = pneg %p122
      %p129 = scmp.eq.s32.totalorder %s19, 1
      %p130 = por %p128, %p129
      %p131 = scmp.ne.s32.totalorder %s123, %s126
      %p132 = scmp.eq.s32.totalorder %s19, 0
      %p133 = por %p131, %p132
      %p134 = scmp.ne.s32.totalorder %s123, %s126
      %p135 = scmp.eq.s32.totalorder %s24, 1
      %p136 = por %p134, %p135
      %p137 = scmp.ne.s32.totalorder %s126, %s127
      %p138 = scmp.eq.s32.totalorder %s24, 0
      %p139 = por %p137, %p138
      %p140 = scmp.ne.s32.totalorder %s126, %s127
      %p141 = scmp.eq.s32.totalorder %s25, 1
      %p142 = por %p140, %p141
      %p144 = scmp.ne.s32.totalorder %s127, %s143
      %p145 = scmp.eq.s32.totalorder %s25, 0
      %p146 = por %p144, %p145
      %s147 = ssub.s32 %s19, %s26
      %p148 = scmp.eq.s32.totalorder %s147, 0
      %s150 = sadd.s32 %s149, 1
      %s151 = scalar_select %p148, %s149, %s150
      %p154 = pneg %p148
      %p155 = scmp.eq.s32.totalorder %s19, 1
      %p156 = por %p154, %p155
      %p157 = scmp.ne.s32.totalorder %s149, %s152
      %p158 = scmp.eq.s32.totalorder %s19, 0
      %p159 = por %p157, %p158
      %p160 = scmp.ne.s32.totalorder %s149, %s152
      %p161 = scmp.eq.s32.totalorder %s24, 1
      %p162 = por %p160, %p161
      %p163 = scmp.ne.s32.totalorder %s152, %s153
      %p164 = scmp.eq.s32.totalorder %s24, 0
      %p165 = por %p163, %p164
      %p166 = scmp.ne.s32.totalorder %s152, %s153
      %p167 = scmp.eq.s32.totalorder %s25, 1
      %p168 = por %p166, %p167
      %p170 = scmp.ne.s32.totalorder %s153, %s169
      %p171 = scmp.eq.s32.totalorder %s25, 0
      %p172 = por %p170, %p171
      %s173 = ssub.s32 %s19, %s26
      %p174 = scmp.eq.s32.totalorder %s173, 0
      %s176 = sadd.s32 %s175, 1
      %s177 = scalar_select %p174, %s175, %s176
      %p180 = pneg %p174
      %p181 = scmp.eq.s32.totalorder %s19, 1
      %p182 = por %p180, %p181
      %p183 = scmp.ne.s32.totalorder %s175, %s178
      %p184 = scmp.eq.s32.totalorder %s19, 0
      %p185 = por %p183, %p184
      %p186 = scmp.ne.s32.totalorder %s175, %s178
      %p187 = scmp.eq.s32.totalorder %s24, 1
      %p188 = por %p186, %p187
      %p189 = scmp.ne.s32.totalorder %s178, %s179
      %p190 = scmp.eq.s32.totalorder %s24, 0
      %p191 = por %p189, %p190
      %p192 = scmp.ne.s32.totalorder %s178, %s179
      %p193 = scmp.eq.s32.totalorder %s25, 1
      %p194 = por %p192, %p193
      %p196 = scmp.ne.s32.totalorder %s179, %s195
      %p197 = scmp.eq.s32.totalorder %s25, 0
      %p198 = por %p196, %p197
      %p199 = scmp.le.s32.totalorder 1, %s19
      %p200 = scmp.lt.s32.totalorder %s19, 3
      %p201 = pnand %p199, %p200
      %p202 = pneg %p201
      // Predicated region
      $region9: #{tpu_custom_call.1} parent=5 // pred_check
        _
      $region10: #{tpu_custom_call.1} parent=5 // pred_check_branch
        %204 = sbr.rel (%p201) target = $region12
      $region11: #{tpu_custom_call.1} parent=5 // pred_region
        %s205 = ssub.s32 %s19, 1
        // Predicated region
        $region13: #{tpu_custom_call.1} parent=11 // pred_check
          %p206 = pneg %p66
        $region14: #{tpu_custom_call.1} parent=11 // pred_check_branch
          %208 = sbr.rel (%p206) target = $region16
        $region15: #{tpu_custom_call.1} parent=11 // pred_region
          _
        $region16: #{tpu_custom_call.1} parent=11 // pred_fallthru
          _
        // Predicated region
        $region17: #{tpu_custom_call.1} parent=11 // pred_check
          %p209 = pneg %p87
        $region18: #{tpu_custom_call.1} parent=11 // pred_check_branch
          %211 = sbr.rel (%p209) target = $region20
        $region19: #{tpu_custom_call.1} parent=11 // pred_region
          _
        $region20: #{tpu_custom_call.1} parent=11 // pred_fallthru
          _
      $region12: #{tpu_custom_call.1} parent=5 // pred_fallthru
        _
      %p212 = scmp.lt.s32.totalorder %s19, 2
      // Predicated region
      $region21: #{tpu_custom_call.1} parent=5 // pred_check
        %p213 = pneg %p212
      $region22: #{tpu_custom_call.1} parent=5 // pred_check_branch
        %215 = sbr.rel (%p213) target = $region24
      $region23: #{tpu_custom_call.1} parent=5 // pred_region
        // Predicated region
        $region25: #{tpu_custom_call.1} parent=23 // pred_check
          %p216 = pneg %p39
        $region26: #{tpu_custom_call.1} parent=23 // pred_check_branch
          %218 = sbr.rel (%p216) target = $region28
        $region27: #{tpu_custom_call.1} parent=23 // pred_region
          %s219 = smul.u32 4, %s19
          %p220 = scmp.lt.s32.totalorder %s219, 7
          %s221 = scalar_select %p220, %s219, 7
          %s222 = smul.addr %s221, 18
          %s223 = smul.addr %s222, 8
          %s224 = scalar_lea.vmem %s0, %s223
          %s225 = smul.u32 4, %s19
        $region28: #{tpu_custom_call.1} parent=23 // pred_fallthru
          _
      $region24: #{tpu_custom_call.1} parent=5 // pred_fallthru
        _
      %p226 = scmp.le.s32.totalorder 1, %s19
      %p227 = scmp.lt.s32.totalorder %s19, 3
      %p228 = pnand %p226, %p227
      %p229 = pneg %p228
      // Predicated region
      $region29: #{tpu_custom_call.1} parent=5 // pred_check
        _
      $region30: #{tpu_custom_call.1} parent=5 // pred_check_branch
        %231 = sbr.rel (%p228) target = $region32
      $region31: #{tpu_custom_call.1} parent=5 // pred_region
        %s232 = ssub.s32 %s19, 1
        %s233 = smul.u32 4, %s24
        %p234 = scmp.lt.s32.totalorder %s233, 7
        %s235 = scalar_select %p234, %s233, 7
        %s236 = smul.addr %s235, 18
        %s237 = smul.addr %s236, 8
        %s238 = scalar_lea.vmem %s0, %s237
        %p239 = pneg %p45
        %p240 = pneg %p42
        %p241 = pneg %p66
        %p242 = pneg %p63
        %p243 = pneg %p87
        %p244 = pneg %p84
        %p245 = pneg %p113
        %p246 = pneg %p110
        %p247 = scmp.lt.s32.totalorder %s24, 1
        %s248 = scalar_select %p247, %s24, 1
        %s249 = smul.addr %s248, 8
        %s250 = smul.addr %s249, 8
        %s251 = scalar_lea.vmem %s3, %s250
        %p252 = pneg %p139
        %p253 = pneg %p136
        %p254 = scmp.lt.s32.totalorder %s24, 1
        %s255 = scalar_select %p254, %s24, 1
        %s256 = smul.addr %s255, 8
        %s257 = smul.addr %s256, 8
        %s258 = scalar_lea.vmem %s4, %s257
        %p259 = pneg %p165
        %p260 = pneg %p162
        %s261 = sand.u32 %s152, 1
        %s262 = scalar_lea.sflag [#allocation4], %s261
        %s263 = sand.u32 %s152, 1
        %s264 = smul.addr %s263, 2
        %s265 = scalar_lea.vmem [#allocation3], %s264
        %p266 = pneg %p191
        %p267 = pneg %p188
        %s268 = sand.u32 %s178, 1
        %s269 = scalar_lea.sflag [#allocation6], %s268
        %s270 = sand.u32 %s178, 1
        %s271 = smul.addr %s270, 2
        %s272 = scalar_lea.vmem [#allocation5], %s271
        %s273 = smul.u32 4, %s24
        %p274 = scmp.lt.s32.totalorder %s273, 7
        %s275 = scalar_select %p274, %s273, 7
        %s276 = smul.addr %s275, 18
        %s277 = smul.addr %s276, 8
        %s278 = scalar_lea.vmem %s0, %s277
        %s279 = smul.u32 4, %s24
        %p280 = scmp.lt.s32.totalorder %s24, 1
        %s281 = scalar_select %p280, %s24, 1
        %s282 = smul.addr %s281, 8
        %s283 = smul.addr %s282, 8
        %s284 = scalar_lea.vmem %s3, %s283
        %p285 = scmp.lt.s32.totalorder %s24, 1
        %s286 = scalar_select %p285, %s24, 1
        %s287 = smul.addr %s286, 8
        %s288 = smul.addr %s287, 8
        %s289 = scalar_lea.vmem %s4, %s288
        %v290 = vld [vmem:[%s278] sm:$0xff]
        %v291 = vld [vmem:[%s278 + $0x10] sm:$0xff]
        %v292 = vld [vmem:[%s278 + $0x20] sm:$0xff]
        %v293 = vld [vmem:[%s278 + $0x30] sm:$0xff]
        %v294 = vld [vmem:[%s278 + $0x40] sm:$0xff]
        %v295 = vld [vmem:[%s278 + $0x50] sm:$0xff]
        %v296 = vld [vmem:[%s278 + $0x60] sm:$0xff]
        %v297 = vld [vmem:[%s278 + $0x70] sm:$0xff]
        %vm298 = vcmask 31744
        %299 = vst.msk [vmem:[#allocation2] sm:$0xff] %vm298, %v290
        %300 = vst.msk [vmem:[#allocation2 + $0x8] sm:$0xff] %vm298, %v291
        %301 = vst.msk [vmem:[#allocation2 + $0x10] sm:$0xff] %vm298, %v292
        %302 = vst.msk [vmem:[#allocation2 + $0x18] sm:$0xff] %vm298, %v293
        %303 = vst.msk [vmem:[#allocation2 + $0x20] sm:$0xff] %vm298, %v294
        %304 = vst.msk [vmem:[#allocation2 + $0x28] sm:$0xff] %vm298, %v295
        %305 = vst.msk [vmem:[#allocation2 + $0x30] sm:$0xff] %vm298, %v296
        %306 = vst.msk [vmem:[#allocation2 + $0x38] sm:$0xff] %vm298, %v297
        %s307 = scalar_lea.vmem %s278, 144
        %v308 = vld [vmem:[%s307] sm:$0xff]
        %v309 = vld [vmem:[%s307 + $0x10] sm:$0xff]
        %v310 = vld [vmem:[%s307 + $0x20] sm:$0xff]
        %v311 = vld [vmem:[%s307 + $0x30] sm:$0xff]
        %v312 = vld [vmem:[%s307 + $0x40] sm:$0xff]
        %v313 = vld [vmem:[%s307 + $0x50] sm:$0xff]
        %v314 = vld [vmem:[%s307 + $0x60] sm:$0xff]
        %v315 = vld [vmem:[%s307 + $0x70] sm:$0xff]
        %324 = vrot.lane.b32.xlu0 %v308, 4
        %v325 = vpop.permute.xlu0 %324
        %326 = vrot.lane.b32.xlu0 %v309, 4
        %v327 = vpop.permute.xlu0 %326
        %328 = vrot.lane.b32.xlu0 %v310, 4
        %v329 = vpop.permute.xlu0 %328
        %330 = vrot.lane.b32.xlu0 %v311, 4
        %v331 = vpop.permute.xlu0 %330
        %332 = vrot.lane.b32.xlu0 %v312, 4
        %v333 = vpop.permute.xlu0 %332
        %334 = vrot.lane.b32.xlu0 %v313, 4
        %v335 = vpop.permute.xlu0 %334
        %336 = vrot.lane.b32.xlu0 %v314, 4
        %v337 = vpop.permute.xlu0 %336
        %338 = vrot.lane.b32.xlu0 %v315, 4
        %v339 = vpop.permute.xlu0 %338
        %vm348 = vcmask 64544
        %349 = vst.msk [vmem:[#allocation2] sm:$0xff] %vm348, %v325
        %350 = vst.msk [vmem:[#allocation2 + $0x8] sm:$0xff] %vm348, %v327
        %351 = vst.msk [vmem:[#allocation2 + $0x10] sm:$0xff] %vm348, %v329
        %352 = vst.msk [vmem:[#allocation2 + $0x18] sm:$0xff] %vm348, %v331
        %353 = vst.msk [vmem:[#allocation2 + $0x20] sm:$0xff] %vm348, %v333
        %354 = vst.msk [vmem:[#allocation2 + $0x28] sm:$0xff] %vm348, %v335
        %355 = vst.msk [vmem:[#allocation2 + $0x30] sm:$0xff] %vm348, %v337
        %356 = vst.msk [vmem:[#allocation2 + $0x38] sm:$0xff] %vm348, %v339
        %v357 = vld [vmem:[%s278 + $0x1] sm:$0xff]
        %v358 = vld [vmem:[%s278 + $0x11] sm:$0xff]
        %v359 = vld [vmem:[%s278 + $0x21] sm:$0xff]
        %v360 = vld [vmem:[%s278 + $0x31] sm:$0xff]
        %v361 = vld [vmem:[%s278 + $0x41] sm:$0xff]
        %v362 = vld [vmem:[%s278 + $0x51] sm:$0xff]
        %v363 = vld [vmem:[%s278 + $0x61] sm:$0xff]
        %v364 = vld [vmem:[%s278 + $0x71] sm:$0xff]
        %373 = vrot.lane.b32.xlu0 %v357, 8
        %v374 = vpop.permute.xlu0 %373
        %375 = vrot.lane.b32.xlu0 %v358, 8
        %v376 = vpop.permute.xlu0 %375
        %377 = vrot.lane.b32.xlu0 %v359, 8
        %v378 = vpop.permute.xlu0 %377
        %379 = vrot.lane.b32.xlu0 %v360, 8
        %v380 = vpop.permute.xlu0 %379
        %381 = vrot.lane.b32.xlu0 %v361, 8
        %v382 = vpop.permute.xlu0 %381
        %383 = vrot.lane.b32.xlu0 %v362, 8
        %v384 = vpop.permute.xlu0 %383
        %385 = vrot.lane.b32.xlu0 %v363, 8
        %v386 = vpop.permute.xlu0 %385
        %387 = vrot.lane.b32.xlu0 %v364, 8
        %v388 = vpop.permute.xlu0 %387
        %vm397 = vcmask 97344
        %398 = vst.msk [vmem:[#allocation2] sm:$0xff] %vm397, %v374
        %399 = vst.msk [vmem:[#allocation2 + $0x8] sm:$0xff] %vm397, %v376
        %400 = vst.msk [vmem:[#allocation2 + $0x10] sm:$0xff] %vm397, %v378
        %401 = vst.msk [vmem:[#allocation2 + $0x18] sm:$0xff] %vm397, %v380
        %402 = vst.msk [vmem:[#allocation2 + $0x20] sm:$0xff] %vm397, %v382
        %403 = vst.msk [vmem:[#allocation2 + $0x28] sm:$0xff] %vm397, %v384
        %404 = vst.msk [vmem:[#allocation2 + $0x30] sm:$0xff] %vm397, %v386
        %405 = vst.msk [vmem:[#allocation2 + $0x38] sm:$0xff] %vm397, %v388
        %s406 = scalar_lea.vmem %s278, 288
        %v407 = vld [vmem:[%s406] sm:$0xff]
        %v408 = vld [vmem:[%s406 + $0x10] sm:$0xff]
        %v409 = vld [vmem:[%s406 + $0x20] sm:$0xff]
        %v410 = vld [vmem:[%s406 + $0x30] sm:$0xff]
        %v411 = vld [vmem:[%s406 + $0x40] sm:$0xff]
        %v412 = vld [vmem:[%s406 + $0x50] sm:$0xff]
        %v413 = vld [vmem:[%s406 + $0x60] sm:$0xff]
        %v414 = vld [vmem:[%s406 + $0x70] sm:$0xff]
        %423 = vrot.lane.b32.xlu0 %v407, 12
        %v424 = vpop.permute.xlu0 %423
        %425 = vrot.lane.b32.xlu0 %v408, 12
        %v426 = vpop.permute.xlu0 %425
        %427 = vrot.lane.b32.xlu0 %v409, 12
        %v428 = vpop.permute.xlu0 %427
        %429 = vrot.lane.b32.xlu0 %v410, 12
        %v430 = vpop.permute.xlu0 %429
        %431 = vrot.lane.b32.xlu0 %v411, 12
        %v432 = vpop.permute.xlu0 %431
        %433 = vrot.lane.b32.xlu0 %v412, 12
        %v434 = vpop.permute.xlu0 %433
        %435 = vrot.lane.b32.xlu0 %v413, 12
        %v436 = vpop.permute.xlu0 %435
        %437 = vrot.lane.b32.xlu0 %v414, 12
        %v438 = vpop.permute.xlu0 %437
        %vm447 = vcmask 130144
        %448 = vst.msk [vmem:[#allocation2] sm:$0xff] %vm447, %v424
        %449 = vst.msk [vmem:[#allocation2 + $0x8] sm:$0xff] %vm447, %v426
        %450 = vst.msk [vmem:[#allocation2 + $0x10] sm:$0xff] %vm447, %v428
        %451 = vst.msk [vmem:[#allocation2 + $0x18] sm:$0xff] %vm447, %v430
        %452 = vst.msk [vmem:[#allocation2 + $0x20] sm:$0xff] %vm447, %v432
        %453 = vst.msk [vmem:[#allocation2 + $0x28] sm:$0xff] %vm447, %v434
        %454 = vst.msk [vmem:[#allocation2 + $0x30] sm:$0xff] %vm447, %v436
        %455 = vst.msk [vmem:[#allocation2 + $0x38] sm:$0xff] %vm447, %v438
        %s456 = scalar_lea.vmem %s278, 432
        %v457 = vld [vmem:[%s456] sm:$0xff]
        %v458 = vld [vmem:[%s456 + $0x10] sm:$0xff]
        %v459 = vld [vmem:[%s456 + $0x20] sm:$0xff]
        %v460 = vld [vmem:[%s456 + $0x30] sm:$0xff]
        %v461 = vld [vmem:[%s456 + $0x40] sm:$0xff]
        %v462 = vld [vmem:[%s456 + $0x50] sm:$0xff]
        %v463 = vld [vmem:[%s456 + $0x60] sm:$0xff]
        %v464 = vld [vmem:[%s456 + $0x70] sm:$0xff]
        %473 = vrot.lane.b32.xlu0 %v457, 16
        %v474 = vpop.permute.xlu0 %473
        %475 = vrot.lane.b32.xlu0 %v458, 16
        %v476 = vpop.permute.xlu0 %475
        %477 = vrot.lane.b32.xlu0 %v459, 16
        %v478 = vpop.permute.xlu0 %477
        %479 = vrot.lane.b32.xlu0 %v460, 16
        %v480 = vpop.permute.xlu0 %479
        %481 = vrot.lane.b32.xlu0 %v461, 16
        %v482 = vpop.permute.xlu0 %481
        %483 = vrot.lane.b32.xlu0 %v462, 16
        %v484 = vpop.permute.xlu0 %483
        %485 = vrot.lane.b32.xlu0 %v463, 16
        %v486 = vpop.permute.xlu0 %485
        %487 = vrot.lane.b32.xlu0 %v464, 16
        %v488 = vpop.permute.xlu0 %487
        %vm497 = vcmask 162944
        %498 = vst.msk [vmem:[#allocation2] sm:$0xff] %vm497, %v474
        %499 = vst.msk [vmem:[#allocation2 + $0x8] sm:$0xff] %vm497, %v476
        %500 = vst.msk [vmem:[#allocation2 + $0x10] sm:$0xff] %vm497, %v478
        %501 = vst.msk [vmem:[#allocation2 + $0x18] sm:$0xff] %vm497, %v480
        %502 = vst.msk [vmem:[#allocation2 + $0x20] sm:$0xff] %vm497, %v482
        %503 = vst.msk [vmem:[#allocation2 + $0x28] sm:$0xff] %vm497, %v484
        %504 = vst.msk [vmem:[#allocation2 + $0x30] sm:$0xff] %vm497, %v486
        %505 = vst.msk [vmem:[#allocation2 + $0x38] sm:$0xff] %vm497, %v488
        %v506 = vld [vmem:[%s406 + $0x1] sm:$0xff]
        %v507 = vld [vmem:[%s406 + $0x11] sm:$0xff]
        %v508 = vld [vmem:[%s406 + $0x21] sm:$0xff]
        %v509 = vld [vmem:[%s406 + $0x31] sm:$0xff]
        %v510 = vld [vmem:[%s406 + $0x41] sm:$0xff]
        %v511 = vld [vmem:[%s406 + $0x51] sm:$0xff]
        %v512 = vld [vmem:[%s406 + $0x61] sm:$0xff]
        %v513 = vld [vmem:[%s406 + $0x71] sm:$0xff]
        %522 = vrot.lane.b32.xlu0 %v506, 20
        %v523 = vpop.permute.xlu0 %522
        %524 = vrot.lane.b32.xlu0 %v507, 20
        %v525 = vpop.permute.xlu0 %524
        %526 = vrot.lane.b32.xlu0 %v508, 20
        %v527 = vpop.permute.xlu0 %526
        %528 = vrot.lane.b32.xlu0 %v509, 20
        %v529 = vpop.permute.xlu0 %528
        %530 = vrot.lane.b32.xlu0 %v510, 20
        %v531 = vpop.permute.xlu0 %530
        %532 = vrot.lane.b32.xlu0 %v511, 20
        %v533 = vpop.permute.xlu0 %532
        %534 = vrot.lane.b32.xlu0 %v512, 20
        %v535 = vpop.permute.xlu0 %534
        %536 = vrot.lane.b32.xlu0 %v513, 20
        %v537 = vpop.permute.xlu0 %536
        %vm546 = vcmask 195744
        %547 = vst.msk [vmem:[#allocation2] sm:$0xff] %vm546, %v523
        %548 = vst.msk [vmem:[#allocation2 + $0x8] sm:$0xff] %vm546, %v525
        %549 = vst.msk [vmem:[#allocation2 + $0x10] sm:$0xff] %vm546, %v527
        %550 = vst.msk [vmem:[#allocation2 + $0x18] sm:$0xff] %vm546, %v529
        %551 = vst.msk [vmem:[#allocation2 + $0x20] sm:$0xff] %vm546, %v531
        %552 = vst.msk [vmem:[#allocation2 + $0x28] sm:$0xff] %vm546, %v533
        %553 = vst.msk [vmem:[#allocation2 + $0x30] sm:$0xff] %vm546, %v535
        %554 = vst.msk [vmem:[#allocation2 + $0x38] sm:$0xff] %vm546, %v537
        %s555 = scalar_lea.vmem %s278, 16
        %v556 = vld [vmem:[%s555] sm:$0xff]
        %v557 = vld [vmem:[%s555 + $0x10] sm:$0xff]
        %v558 = vld [vmem:[%s555 + $0x20] sm:$0xff]
        %v559 = vld [vmem:[%s555 + $0x30] sm:$0xff]
        %v560 = vld [vmem:[%s555 + $0x40] sm:$0xff]
        %v561 = vld [vmem:[%s555 + $0x50] sm:$0xff]
        %v562 = vld [vmem:[%s555 + $0x60] sm:$0xff]
        %v563 = vld [vmem:[%s555 + $0x70] sm:$0xff]
        %572 = vrot.lane.b32.xlu0 %v556, 24
        %v573 = vpop.permute.xlu0 %572
        %574 = vrot.lane.b32.xlu0 %v557, 24
        %v575 = vpop.permute.xlu0 %574
        %576 = vrot.lane.b32.xlu0 %v558, 24
        %v577 = vpop.permute.xlu0 %576
        %578 = vrot.lane.b32.xlu0 %v559, 24
        %v579 = vpop.permute.xlu0 %578
        %580 = vrot.lane.b32.xlu0 %v560, 24
        %v581 = vpop.permute.xlu0 %580
        %582 = vrot.lane.b32.xlu0 %v561, 24
        %v583 = vpop.permute.xlu0 %582
        %584 = vrot.lane.b32.xlu0 %v562, 24
        %v585 = vpop.permute.xlu0 %584
        %586 = vrot.lane.b32.xlu0 %v563, 24
        %v587 = vpop.permute.xlu0 %586
        %vm596 = vcmask 228544
        %597 = vst.msk [vmem:[#allocation2] sm:$0xff] %vm596, %v573
        %598 = vst.msk [vmem:[#allocation2 + $0x8] sm:$0xff] %vm596, %v575
        %599 = vst.msk [vmem:[#allocation2 + $0x10] sm:$0xff] %vm596, %v577
        %600 = vst.msk [vmem:[#allocation2 + $0x18] sm:$0xff] %vm596, %v579
        %601 = vst.msk [vmem:[#allocation2 + $0x20] sm:$0xff] %vm596, %v581
        %602 = vst.msk [vmem:[#allocation2 + $0x28] sm:$0xff] %vm596, %v583
        %603 = vst.msk [vmem:[#allocation2 + $0x30] sm:$0xff] %vm596, %v585
        %604 = vst.msk [vmem:[#allocation2 + $0x38] sm:$0xff] %vm596, %v587
        %s605 = scalar_lea.vmem %s278, 160
        %v606 = vld [vmem:[%s605] sm:$0xff]
        %v607 = vld [vmem:[%s605 + $0x10] sm:$0xff]
        %v608 = vld [vmem:[%s605 + $0x20] sm:$0xff]
        %v609 = vld [vmem:[%s605 + $0x30] sm:$0xff]
        %v610 = vld [vmem:[%s605 + $0x40] sm:$0xff]
        %v611 = vld [vmem:[%s605 + $0x50] sm:$0xff]
        %v612 = vld [vmem:[%s605 + $0x60] sm:$0xff]
        %v613 = vld [vmem:[%s605 + $0x70] sm:$0xff]
        %622 = vrot.lane.b32.xlu0 %v606, 28
        %v623 = vpop.permute.xlu0 %622
        %624 = vrot.lane.b32.xlu0 %v607, 28
        %v625 = vpop.permute.xlu0 %624
        %626 = vrot.lane.b32.xlu0 %v608, 28
        %v627 = vpop.permute.xlu0 %626
        %628 = vrot.lane.b32.xlu0 %v609, 28
        %v629 = vpop.permute.xlu0 %628
        %630 = vrot.lane.b32.xlu0 %v610, 28
        %v631 = vpop.permute.xlu0 %630
        %632 = vrot.lane.b32.xlu0 %v611, 28
        %v633 = vpop.permute.xlu0 %632
        %634 = vrot.lane.b32.xlu0 %v612, 28
        %v635 = vpop.permute.xlu0 %634
        %636 = vrot.lane.b32.xlu0 %v613, 28
        %v637 = vpop.permute.xlu0 %636
        %vm646 = vcmask 261344
        %647 = vst.msk [vmem:[#allocation2] sm:$0xff] %vm646, %v623
        %648 = vst.msk [vmem:[#allocation2 + $0x8] sm:$0xff] %vm646, %v625
        %649 = vst.msk [vmem:[#allocation2 + $0x10] sm:$0xff] %vm646, %v627
        %650 = vst.msk [vmem:[#allocation2 + $0x18] sm:$0xff] %vm646, %v629
        %651 = vst.msk [vmem:[#allocation2 + $0x20] sm:$0xff] %vm646, %v631
        %652 = vst.msk [vmem:[#allocation2 + $0x28] sm:$0xff] %vm646, %v633
        %653 = vst.msk [vmem:[#allocation2 + $0x30] sm:$0xff] %vm646, %v635
        %654 = vst.msk [vmem:[#allocation2 + $0x38] sm:$0xff] %vm646, %v637
        %v655 = vld [vmem:[%s555 + $0x1] sm:$0xff]
        %v656 = vld [vmem:[%s555 + $0x11] sm:$0xff]
        %v657 = vld [vmem:[%s555 + $0x21] sm:$0xff]
        %v658 = vld [vmem:[%s555 + $0x31] sm:$0xff]
        %v659 = vld [vmem:[%s555 + $0x41] sm:$0xff]
        %v660 = vld [vmem:[%s555 + $0x51] sm:$0xff]
        %v661 = vld [vmem:[%s555 + $0x61] sm:$0xff]
        %v662 = vld [vmem:[%s555 + $0x71] sm:$0xff]
        %671 = vrot.lane.b32.xlu0 %v655, 32
        %v672 = vpop.permute.xlu0 %671
        %673 = vrot.lane.b32.xlu0 %v656, 32
        %v674 = vpop.permute.xlu0 %673
        %675 = vrot.lane.b32.xlu0 %v657, 32
        %v676 = vpop.permute.xlu0 %675
        %677 = vrot.lane.b32.xlu0 %v658, 32
        %v678 = vpop.permute.xlu0 %677
        %679 = vrot.lane.b32.xlu0 %v659, 32
        %v680 = vpop.permute.xlu0 %679
        %681 = vrot.lane.b32.xlu0 %v660, 32
        %v682 = vpop.permute.xlu0 %681
        %683 = vrot.lane.b32.xlu0 %v661, 32
        %v684 = vpop.permute.xlu0 %683
        %685 = vrot.lane.b32.xlu0 %v662, 32
        %v686 = vpop.permute.xlu0 %685
        %vm695 = vcmask 294144
        %696 = vst.msk [vmem:[#allocation2] sm:$0xff] %vm695, %v672
        %697 = vst.msk [vmem:[#allocation2 + $0x8] sm:$0xff] %vm695, %v674
        %698 = vst.msk [vmem:[#allocation2 + $0x10] sm:$0xff] %vm695, %v676
        %699 = vst.msk [vmem:[#allocation2 + $0x18] sm:$0xff] %vm695, %v678
        %700 = vst.msk [vmem:[#allocation2 + $0x20] sm:$0xff] %vm695, %v680
        %701 = vst.msk [vmem:[#allocation2 + $0x28] sm:$0xff] %vm695, %v682
        %702 = vst.msk [vmem:[#allocation2 + $0x30] sm:$0xff] %vm695, %v684
        %703 = vst.msk [vmem:[#allocation2 + $0x38] sm:$0xff] %vm695, %v686
        %v704 = vld [vmem:[#allocation2] sm:$0xff]
        %v705 = vld [vmem:[#allocation2 + $0x8] sm:$0xff]
        %v706 = vld [vmem:[#allocation2 + $0x10] sm:$0xff]
        %v707 = vld [vmem:[#allocation2 + $0x18] sm:$0xff]
        %v708 = vld [vmem:[#allocation2 + $0x20] sm:$0xff]
        %v709 = vld [vmem:[#allocation2 + $0x28] sm:$0xff]
        %v710 = vld [vmem:[#allocation2 + $0x30] sm:$0xff]
        %v711 = vld [vmem:[#allocation2 + $0x38] sm:$0xff]
        %v712 = vld [vmem:[%s1] sm:$0xff]
        %v713 = vld [vmem:[%s1 + $0x8] sm:$0xff]
        %v714 = vld [vmem:[%s1 + $0x10] sm:$0xff]
        %v715 = vld [vmem:[%s1 + $0x18] sm:$0xff]
        %v716 = vld [vmem:[%s1 + $0x20] sm:$0xf]
        %vm717 = vcmask 293888
        %v719 = vsel %vm717, %v704, 0
        %v722 = vsel %vm717, %v705, 0
        %v725 = vsel %vm717, %v706, 0
        %v728 = vsel %vm717, %v707, 0
        %v731 = vsel %vm717, %v708, 0
        %v734 = vsel %vm717, %v709, 0
        %v737 = vsel %vm717, %v710, 0
        %v740 = vsel %vm717, %v711, 0
        %vm742 = vcmask 1043456
        %v744 = vsel %vm742, %v716, 0
        %746 = vmatprep.subr.mxu0 0.0
        %747 = vmatpush1.msra.mxu0 %v712
        %748 = vmatprep.subr.mxu0 0.0
        %749 = vmatpush1.msra.mxu0 %v713
        %750 = vmatprep.subr.mxu0 0.0
        %751 = vmatpush1.msra.mxu0 %v714
        %752 = vmatprep.subr.mxu0 0.0
        %753 = vmatpush1.msra.mxu0 %v715
        %754 = vmatprep.subr.mxu0 0.0
        %755 = vmatpush1.msra.mxu0 %v744
        %756 = vmatprep.subr.mxu0 0.0
        %757 = vmatpush1.msra.mxu0 0.0
        %758 = vmatprep.subr.mxu0 0.0
        %759 = vmatpush1.msra.mxu0 0.0
        %760 = vmatprep.subr.mxu0 0.0
        %761 = vmatpush1.msra.mxu0 0.0
        %762 = vmatprep.subr.mxu0 0.0
        %763 = vmatpush1.msra.mxu0 0.0
        %764 = vmatprep.subr.mxu0 0.0
        %765 = vmatpush1.msra.mxu0 0.0
        %766 = vmatprep.subr.mxu0 0.0
        %767 = vmatpush1.msra.mxu0 0.0
        %768 = vmatprep.subr.mxu0 0.0
        %769 = vmatpush1.msra.mxu0 0.0
        %770 = vmatprep.subr.mxu0 0.0
        %771 = vmatpush1.msra.mxu0 0.0
        %772 = vmatprep.subr.mxu0 0.0
        %773 = vmatpush1.msra.mxu0 0.0
        %774 = vmatprep.subr.mxu0 0.0
        %775 = vmatpush1.msra.mxu0 0.0
        %776 = vmatprep.subr.mxu0 0.0
        %777 = vmatpush1.msra.mxu0 0.0
        %778 = vmatprep.subr.mxu0 0.0
        %779 = vmatpush1.msra.mxu0 0.0
        %780 = vmatprep.subr.mxu0 0.0
        %781 = vmatpush1.msra.mxu0 0.0
        %782 = vmatprep.subr.mxu0 0.0
        %783 = vmatpush1.msra.mxu0 0.0
        %784 = vmatprep.subr.mxu0 0.0
        %785 = vmatpush1.msra.mxu0 0.0
        %786 = vmatprep.subr.mxu0 0.0
        %787 = vmatpush1.msra.mxu0 0.0
        %788 = vmatprep.subr.mxu0 0.0
        %789 = vmatpush1.msra.mxu0 0.0
        %790 = vmatprep.subr.mxu0 0.0
        %791 = vmatpush1.msra.mxu0 0.0
        %792 = vmatprep.subr.mxu0 0.0
        %793 = vmatpush1.msra.mxu0 0.0
        %794 = vmatprep.subr.mxu0 0.0
        %795 = vmatpush1.msra.mxu0 0.0
        %796 = vmatprep.subr.mxu0 0.0
        %797 = vmatpush1.msra.mxu0 0.0
        %798 = vmatprep.subr.mxu0 0.0
        %799 = vmatpush1.msra.mxu0 0.0
        %800 = vmatprep.subr.mxu0 0.0
        %801 = vmatpush1.msra.mxu0 0.0
        %802 = vmatprep.subr.mxu0 0.0
        %803 = vmatpush1.msra.mxu0 0.0
        %804 = vmatprep.subr.mxu0 0.0
        %805 = vmatpush1.msra.mxu0 0.0
        %806 = vmatprep.subr.mxu0 0.0
        %807 = vmatpush1.msra.mxu0 0.0
        %808 = vmatprep.subr.mxu0 0.0
        %809 = vmatpush1.msra.mxu0 0.0
        %810 = vmatprep.mubr.f32.mxu0 0.0
        %811 = vmatmul.mubr.f32.gmra.mrb[0].mxu0 %v719
        %v812 = vpop.f32.mrb[0].mxu0
        %v813 = vadd.f32 0.0, %v812
        %v814 = vpop.f32.mrb[0].mxu0
        %815 = vmatprep.mubr.f32.mxu0 0.0
        %816 = vmatmul.mubr.f32.gmra.mrb[0].mxu0 %v722
        %v817 = vpop.f32.mrb[0].mxu0
        %v818 = vadd.f32 0.0, %v817
        %v819 = vpop.f32.mrb[0].mxu0
        %820 = vmatprep.mubr.f32.mxu0 0.0
        %821 = vmatmul.mubr.f32.gmra.mrb[0].mxu0 %v725
        %v822 = vpop.f32.mrb[0].mxu0
        %v823 = vadd.f32 0.0, %v822
        %v824 = vpop.f32.mrb[0].mxu0
        %825 = vmatprep.mubr.f32.mxu0 0.0
        %826 = vmatmul.mubr.f32.gmra.mrb[0].mxu0 %v728
        %v827 = vpop.f32.mrb[0].mxu0
        %v828 = vadd.f32 0.0, %v827
        %v829 = vpop.f32.mrb[0].mxu0
        %830 = vmatprep.mubr.f32.mxu0 0.0
        %831 = vmatmul.mubr.f32.gmra.mrb[0].mxu0 %v731
        %v832 = vpop.f32.mrb[0].mxu0
        %v833 = vadd.f32 0.0, %v832
        %v834 = vpop.f32.mrb[0].mxu0
        %835 = vmatprep.mubr.f32.mxu0 0.0
        %836 = vmatmul.mubr.f32.gmra.mrb[0].mxu0 %v734
        %v837 = vpop.f32.mrb[0].mxu0
        %v838 = vadd.f32 0.0, %v837
        %v839 = vpop.f32.mrb[0].mxu0
        %840 = vmatprep.mubr.f32.mxu0 0.0
        %841 = vmatmul.mubr.f32.gmra.mrb[0].mxu0 %v737
        %v842 = vpop.f32.mrb[0].mxu0
        %v843 = vadd.f32 0.0, %v842
        %v844 = vpop.f32.mrb[0].mxu0
        %845 = vmatprep.mubr.f32.mxu0 0.0
        %846 = vmatmul.mubr.f32.gmra.mrb[0].mxu0 %v740
        %v847 = vpop.f32.mrb[0].mxu0
        %v848 = vadd.f32 0.0, %v847
        %v849 = vpop.f32.mrb[0].mxu0
        %850 = vdwg.mxu0
        %vm851 = vcmask 64512
        %852 = vst.msk [vmem:[%s284] sm:$0xff] %vm851, %v813
        %853 = vst.msk [vmem:[%s284 + $0x8] sm:$0xff] %vm851, %v818
        %854 = vst.msk [vmem:[%s284 + $0x10] sm:$0xff] %vm851, %v823
        %855 = vst.msk [vmem:[%s284 + $0x18] sm:$0xff] %vm851, %v828
        %856 = vst.msk [vmem:[%s284 + $0x20] sm:$0xff] %vm851, %v833
        %857 = vst.msk [vmem:[%s284 + $0x28] sm:$0xff] %vm851, %v838
        %858 = vst.msk [vmem:[%s284 + $0x30] sm:$0xff] %vm851, %v843
        %859 = vst.msk [vmem:[%s284 + $0x38] sm:$0xff] %vm851, %v848
        %v860 = vld [vmem:[%s2] sm:$0xf]
        %861 = vrot.lane.b32.xlu0 %v704, 112
        %v862 = vpop.permute.xlu0 %861
        %863 = vrot.lane.b32.xlu0 %v705, 112
        %v864 = vpop.permute.xlu0 %863
        %865 = vrot.lane.b32.xlu0 %v706, 112
        %v866 = vpop.permute.xlu0 %865
        %867 = vrot.lane.b32.xlu0 %v707, 112
        %v868 = vpop.permute.xlu0 %867
        %869 = vrot.lane.b32.xlu0 %v708, 112
        %v870 = vpop.permute.xlu0 %869
        %871 = vrot.lane.b32.xlu0 %v709, 112
        %v872 = vpop.permute.xlu0 %871
        %873 = vrot.lane.b32.xlu0 %v710, 112
        %v874 = vpop.permute.xlu0 %873
        %875 = vrot.lane.b32.xlu0 %v711, 112
        %v876 = vpop.permute.xlu0 %875
        %v877 = vsel %vm298, %v862, 0
        %v879 = vsel %vm298, %v864, 0
        %v881 = vsel %vm298, %v866, 0
        %v883 = vsel %vm298, %v868, 0
        %v885 = vsel %vm298, %v870, 0
        %v887 = vsel %vm298, %v872, 0
        %v889 = vsel %vm298, %v874, 0
        %v891 = vsel %vm298, %v876, 0
        %v894 = vsel %vm742, %v860, 0
        %896 = vmatprep.subr.mxu0 0.0
        %897 = vmatpush1.msra.mxu0 %v894
        %898 = vmatprep.subr.mxu0 0.0
        %899 = vmatpush1.msra.mxu0 0.0
        %900 = vmatprep.subr.mxu0 0.0
        %901 = vmatpush1.msra.mxu0 0.0
        %902 = vmatprep.subr.mxu0 0.0
        %903 = vmatpush1.msra.mxu0 0.0
        %904 = vmatprep.subr.mxu0 0.0
        %905 = vmatpush1.msra.mxu0 0.0
        %906 = vmatprep.subr.mxu0 0.0
        %907 = vmatpush1.msra.mxu0 0.0
        %908 = vmatprep.subr.mxu0 0.0
        %909 = vmatpush1.msra.mxu0 0.0
        %910 = vmatprep.subr.mxu0 0.0
        %911 = vmatpush1.msra.mxu0 0.0
        %912 = vmatprep.subr.mxu0 0.0
        %913 = vmatpush1.msra.mxu0 0.0
        %914 = vmatprep.subr.mxu0 0.0
        %915 = vmatpush1.msra.mxu0 0.0
        %916 = vmatprep.subr.mxu0 0.0
        %917 = vmatpush1.msra.mxu0 0.0
        %918 = vmatprep.subr.mxu0 0.0
        %919 = vmatpush1.msra.mxu0 0.0
        %920 = vmatprep.subr.mxu0 0.0
        %921 = vmatpush1.msra.mxu0 0.0
        %922 = vmatprep.subr.mxu0 0.0
        %923 = vmatpush1.msra.mxu0 0.0
        %924 = vmatprep.subr.mxu0 0.0
        %925 = vmatpush1.msra.mxu0 0.0
        %926 = vmatprep.subr.mxu0 0.0
        %927 = vmatpush1.msra.mxu0 0.0
        %928 = vmatprep.subr.mxu0 0.0
        %929 = vmatpush1.msra.mxu0 0.0
        %930 = vmatprep.subr.mxu0 0.0
        %931 = vmatpush1.msra.mxu0 0.0
        %932 = vmatprep.subr.mxu0 0.0
        %933 = vmatpush1.msra.mxu0 0.0
        %934 = vmatprep.subr.mxu0 0.0
        %935 = vmatpush1.msra.mxu0 0.0
        %936 = vmatprep.subr.mxu0 0.0
        %937 = vmatpush1.msra.mxu0 0.0
        %938 = vmatprep.subr.mxu0 0.0
        %939 = vmatpush1.msra.mxu0 0.0
        %940 = vmatprep.subr.mxu0 0.0
        %941 = vmatpush1.msra.mxu0 0.0
        %942 = vmatprep.subr.mxu0 0.0
        %943 = vmatpush1.msra.mxu0 0.0
        %944 = vmatprep.subr.mxu0 0.0
        %945 = vmatpush1.msra.mxu0 0.0
        %946 = vmatprep.subr.mxu0 0.0
        %947 = vmatpush1.msra.mxu0 0.0
        %948 = vmatprep.subr.mxu0 0.0
        %949 = vmatpush1.msra.mxu0 0.0
        %950 = vmatprep.subr.mxu0 0.0
        %951 = vmatpush1.msra.mxu0 0.0
        %952 = vmatprep.subr.mxu0 0.0
        %953 = vmatpush1.msra.mxu0 0.0
        %954 = vmatprep.subr.mxu0 0.0
        %955 = vmatpush1.msra.mxu0 0.0
        %956 = vmatprep.subr.mxu0 0.0
        %957 = vmatpush1.msra.mxu0 0.0
        %958 = vmatprep.subr.mxu0 0.0
        %959 = vmatpush1.msra.mxu0 0.0
        %960 = vmatprep.mubr.f32.mxu0 0.0
        %961 = vmatmul.mubr.f32.gmra.mrb[0].mxu0 %v877
        %v962 = vpop.f32.mrb[0].mxu0
        %v963 = vadd.f32 0.0, %v962
        %v964 = vpop.f32.mrb[0].mxu0
        %965 = vmatprep.mubr.f32.mxu0 0.0
        %966 = vmatmul.mubr.f32.gmra.mrb[0].mxu0 %v879
        %v967 = vpop.f32.mrb[0].mxu0
        %v968 = vadd.f32 0.0, %v967
        %v969 = vpop.f32.mrb[0].mxu0
        %970 = vmatprep.mubr.f32.mxu0 0.0
        %971 = vmatmul.mubr.f32.gmra.mrb[0].mxu0 %v881
        %v972 = vpop.f32.mrb[0].mxu0
        %v973 = vadd.f32 0.0, %v972
        %v974 = vpop.f32.mrb[0].mxu0
        %975 = vmatprep.mubr.f32.mxu0 0.0
        %976 = vmatmul.mubr.f32.gmra.mrb[0].mxu0 %v883
        %v977 = vpop.f32.mrb[0].mxu0
        %v978 = vadd.f32 0.0, %v977
        %v979 = vpop.f32.mrb[0].mxu0
        %980 = vmatprep.mubr.f32.mxu0 0.0
        %981 = vmatmul.mubr.f32.gmra.mrb[0].mxu0 %v885
        %v982 = vpop.f32.mrb[0].mxu0
        %v983 = vadd.f32 0.0, %v982
        %v984 = vpop.f32.mrb[0].mxu0
        %985 = vmatprep.mubr.f32.mxu0 0.0
        %986 = vmatmul.mubr.f32.gmra.mrb[0].mxu0 %v887
        %v987 = vpop.f32.mrb[0].mxu0
        %v988 = vadd.f32 0.0, %v987
        %v989 = vpop.f32.mrb[0].mxu0
        %990 = vmatprep.mubr.f32.mxu0 0.0
        %991 = vmatmul.mubr.f32.gmra.mrb[0].mxu0 %v889
        %v992 = vpop.f32.mrb[0].mxu0
        %v993 = vadd.f32 0.0, %v992
        %v994 = vpop.f32.mrb[0].mxu0
        %995 = vmatprep.mubr.f32.mxu0 0.0
        %996 = vmatmul.mubr.f32.gmra.mrb[0].mxu0 %v891
        %v997 = vpop.f32.mrb[0].mxu0
        %v998 = vadd.f32 0.0, %v997
        %v999 = vpop.f32.mrb[0].mxu0
        %1000 = vdwg.mxu0
        %1001 = vst.msk [vmem:[%s289] sm:$0xff] %vm851, %v963
        %1002 = vst.msk [vmem:[%s289 + $0x8] sm:$0xff] %vm851, %v968
        %1003 = vst.msk [vmem:[%s289 + $0x10] sm:$0xff] %vm851, %v973
        %1004 = vst.msk [vmem:[%s289 + $0x18] sm:$0xff] %vm851, %v978
        %1005 = vst.msk [vmem:[%s289 + $0x20] sm:$0xff] %vm851, %v983
        %1006 = vst.msk [vmem:[%s289 + $0x28] sm:$0xff] %vm851, %v988
        %1007 = vst.msk [vmem:[%s289 + $0x30] sm:$0xff] %vm851, %v993
        %1008 = vst.msk [vmem:[%s289 + $0x38] sm:$0xff] %vm851, %v998
        %v1009 = vsel %vm851, %v813, 0.0
        %v1010 = vsel %vm851, %v818, 0.0
        %v1011 = vadd.f32 %v1009, %v1010
        %v1012 = vsel %vm851, %v823, 0.0
        %v1013 = vadd.f32 %v1011, %v1012
        %v1014 = vsel %vm851, %v828, 0.0
        %v1015 = vadd.f32 %v1013, %v1014
        %v1016 = vsel %vm851, %v833, 0.0
        %v1017 = vadd.f32 %v1015, %v1016
        %v1018 = vsel %vm851, %v838, 0.0
        %v1019 = vadd.f32 %v1017, %v1018
        %v1020 = vsel %vm851, %v843, 0.0
        %v1021 = vadd.f32 %v1019, %v1020
        %v1022 = vsel %vm851, %v848, 0.0
        %v1023 = vadd.f32 %v1021, %v1022
        %v1024 = vrot.slane %v1023, 4
        %v1025 = vadd.f32 %v1023, %v1024
        %v1026 = vrot.slane %v1025, 2
        %v1027 = vadd.f32 %v1025, %v1026
        %v1028 = vrot.slane %v1027, 1
        %v1029 = vadd.f32 %v1027, %v1028
        %v1030 = vmul.f32 %v1029, 0.015625
        %v1031 = vsub.f32 %v813, %v1030
        %v1032 = vsub.f32 %v818, %v1030
        %v1033 = vsub.f32 %v823, %v1030
        %v1034 = vsub.f32 %v828, %v1030
        %v1035 = vsub.f32 %v833, %v1030
        %v1036 = vsub.f32 %v838, %v1030
        %v1037 = vsub.f32 %v843, %v1030
        %v1038 = vsub.f32 %v848, %v1030
        %v1039 = vmul.f32 %v1031, %v1031
        %v1040 = vmul.f32 %v1032, %v1032
        %v1041 = vmul.f32 %v1033, %v1033
        %v1042 = vmul.f32 %v1034, %v1034
        %v1043 = vmul.f32 %v1035, %v1035
        %v1044 = vmul.f32 %v1036, %v1036
        %v1045 = vmul.f32 %v1037, %v1037
        %v1046 = vmul.f32 %v1038, %v1038
        %v1047 = vsel %vm851, %v1039, 0.0
        %v1048 = vsel %vm851, %v1040, 0.0
        %v1049 = vadd.f32 %v1047, %v1048
        %v1050 = vsel %vm851, %v1041, 0.0
        %v1051 = vadd.f32 %v1049, %v1050
        %v1052 = vsel %vm851, %v1042, 0.0
        %v1053 = vadd.f32 %v1051, %v1052
        %v1054 = vsel %vm851, %v1043, 0.0
        %v1055 = vadd.f32 %v1053, %v1054
        %v1056 = vsel %vm851, %v1044, 0.0
        %v1057 = vadd.f32 %v1055, %v1056
        %v1058 = vsel %vm851, %v1045, 0.0
        %v1059 = vadd.f32 %v1057, %v1058
        %v1060 = vsel %vm851, %v1046, 0.0
        %v1061 = vadd.f32 %v1059, %v1060
        %v1062 = vrot.slane %v1061, 4
        %v1063 = vadd.f32 %v1061, %v1062
        %v1064 = vrot.slane %v1063, 2
        %v1065 = vadd.f32 %v1063, %v1064
        %v1066 = vrot.slane %v1065, 1
        %v1067 = vadd.f32 %v1065, %v1066
        %vm1068 = vcmask 1040384
        %v1069 = vsel %vm1068, %v1029, %v1067
        %vm1070 = vcmask 58368
        %1071 = vst.msk [vmem:[%s265] sm:$0x3] %vm1070, %v1069
        %v1072 = vsel %vm851, %v963, 0.0
        %v1073 = vsel %vm851, %v968, 0.0
        %v1074 = vadd.f32 %v1072, %v1073
        %v1075 = vsel %vm851, %v973, 0.0
        %v1076 = vadd.f32 %v1074, %v1075
        %v1077 = vsel %vm851, %v978, 0.0
        %v1078 = vadd.f32 %v1076, %v1077
        %v1079 = vsel %vm851, %v983, 0.0
        %v1080 = vadd.f32 %v1078, %v1079
        %v1081 = vsel %vm851, %v988, 0.0
        %v1082 = vadd.f32 %v1080, %v1081
        %v1083 = vsel %vm851, %v993, 0.0
        %v1084 = vadd.f32 %v1082, %v1083
        %v1085 = vsel %vm851, %v998, 0.0
        %v1086 = vadd.f32 %v1084, %v1085
        %v1087 = vrot.slane %v1086, 4
        %v1088 = vadd.f32 %v1086, %v1087
        %v1089 = vrot.slane %v1088, 2
        %v1090 = vadd.f32 %v1088, %v1089
        %v1091 = vrot.slane %v1090, 1
        %v1092 = vadd.f32 %v1090, %v1091
        %v1093 = vmul.f32 %v1092, 0.015625
        %v1094 = vsub.f32 %v963, %v1093
        %v1095 = vsub.f32 %v968, %v1093
        %v1096 = vsub.f32 %v973, %v1093
        %v1097 = vsub.f32 %v978, %v1093
        %v1098 = vsub.f32 %v983, %v1093
        %v1099 = vsub.f32 %v988, %v1093
        %v1100 = vsub.f32 %v993, %v1093
        %v1101 = vsub.f32 %v998, %v1093
        %v1102 = vmul.f32 %v1094, %v1094
        %v1103 = vmul.f32 %v1095, %v1095
        %v1104 = vmul.f32 %v1096, %v1096
        %v1105 = vmul.f32 %v1097, %v1097
        %v1106 = vmul.f32 %v1098, %v1098
        %v1107 = vmul.f32 %v1099, %v1099
        %v1108 = vmul.f32 %v1100, %v1100
        %v1109 = vmul.f32 %v1101, %v1101
        %v1110 = vsel %vm851, %v1102, 0.0
        %v1111 = vsel %vm851, %v1103, 0.0
        %v1112 = vadd.f32 %v1110, %v1111
        %v1113 = vsel %vm851, %v1104, 0.0
        %v1114 = vadd.f32 %v1112, %v1113
        %v1115 = vsel %vm851, %v1105, 0.0
        %v1116 = vadd.f32 %v1114, %v1115
        %v1117 = vsel %vm851, %v1106, 0.0
        %v1118 = vadd.f32 %v1116, %v1117
        %v1119 = vsel %vm851, %v1107, 0.0
        %v1120 = vadd.f32 %v1118, %v1119
        %v1121 = vsel %vm851, %v1108, 0.0
        %v1122 = vadd.f32 %v1120, %v1121
        %v1123 = vsel %vm851, %v1109, 0.0
        %v1124 = vadd.f32 %v1122, %v1123
        %v1125 = vrot.slane %v1124, 4
        %v1126 = vadd.f32 %v1124, %v1125
        %v1127 = vrot.slane %v1126, 2
        %v1128 = vadd.f32 %v1126, %v1127
        %v1129 = vrot.slane %v1128, 1
        %v1130 = vadd.f32 %v1128, %v1129
        %v1131 = vsel %vm1068, %v1092, %v1130
        %1132 = vst.msk [vmem:[%s272] sm:$0x3] %vm1070, %v1131
        %p1133 = scmp.lt.s32.totalorder %s24, 1
        %s1134 = scalar_select %p1133, %s24, 1
        %s1135 = smul.addr %s1134, 8
        %s1136 = smul.addr %s1135, 8
        %s1137 = scalar_lea.vmem %s3, %s1136
        %p1138 = scmp.lt.s32.totalorder %s24, 1
        %s1139 = scalar_select %p1138, %s24, 1
        %s1140 = smul.addr %s1139, 8
        %s1141 = smul.addr %s1140, 8
        %s1142 = scalar_lea.vmem %s4, %s1141
        %s1143 = sand.u32 %s152, 1
        %s1144 = scalar_lea.sflag [#allocation4], %s1143
        %s1145 = sand.u32 %s152, 1
        %s1146 = smul.addr %s1145, 2
        %s1147 = scalar_lea.vmem [#allocation3], %s1146
        %s1148 = sand.u32 %s178, 1
        %s1149 = scalar_lea.sflag [#allocation6], %s1148
        %s1150 = sand.u32 %s178, 1
        %s1151 = smul.addr %s1150, 2
        %s1152 = scalar_lea.vmem [#allocation5], %s1151
        // Predicated region
        $region33: #{tpu_custom_call.1} parent=31 // pred_check
          %p1153 = pneg %p110
        $region34: #{tpu_custom_call.1} parent=31 // pred_check_branch
          %1155 = sbr.rel (%p1153) target = $region36
        $region35: #{tpu_custom_call.1} parent=31 // pred_region
          _
        $region36: #{tpu_custom_call.1} parent=31 // pred_fallthru
          _
        // Predicated region
        $region37: #{tpu_custom_call.1} parent=31 // pred_check
          %p1156 = pneg %p136
        $region38: #{tpu_custom_call.1} parent=31 // pred_check_branch
          %1158 = sbr.rel (%p1156) target = $region40
        $region39: #{tpu_custom_call.1} parent=31 // pred_region
          _
        $region40: #{tpu_custom_call.1} parent=31 // pred_fallthru
          _
        // Predicated region
        $region41: #{tpu_custom_call.1} parent=31 // pred_check
          %p1159 = pneg %p162
        $region42: #{tpu_custom_call.1} parent=31 // pred_check_branch
          %1161 = sbr.rel (%p1159) target = $region44
        $region43: #{tpu_custom_call.1} parent=31 // pred_region
          %s1163 = ssub.s32 32, 32
          %1164 = vsyncadd %s1144, %s1163
          %s1165 = smul.addr %s24, 32
          %s1166 = scalar_lea.hbm %s5, %s1165
          %s1168 = sshll.u32 %s1147, 4
          %s1169 = int_to_ptr.vmem [resolvable:$true] %s1168
          %1171 = dma.vmem_to_hbm [thread:$0]  %s1169, 32, %s1166, %s1144
        $region44: #{tpu_custom_call.1} parent=31 // pred_fallthru
          _
        // Predicated region
        $region45: #{tpu_custom_call.1} parent=31 // pred_check
          %p1172 = pneg %p188
        $region46: #{tpu_custom_call.1} parent=31 // pred_check_branch
          %1174 = sbr.rel (%p1172) target = $region48
        $region47: #{tpu_custom_call.1} parent=31 // pred_region
          %s1176 = ssub.s32 32, 32
          %1177 = vsyncadd %s1149, %s1176
          %s1178 = smul.addr %s24, 32
          %s1179 = scalar_lea.hbm %s6, %s1178
          %s1181 = sshll.u32 %s1152, 4
          %s1182 = int_to_ptr.vmem [resolvable:$true] %s1181
          %1184 = dma.vmem_to_hbm [thread:$0]  %s1182, 32, %s1179, %s1149
        $region48: #{tpu_custom_call.1} parent=31 // pred_fallthru
          _
      $region32: #{tpu_custom_call.1} parent=5 // pred_fallthru
        _
      %p1185 = scmp.le.s32.totalorder 2, %s19
      // Predicated region
      $region49: #{tpu_custom_call.1} parent=5 // pred_check
        %p1186 = pneg %p1185
      $region50: #{tpu_custom_call.1} parent=5 // pred_check_branch
        %1188 = sbr.rel (%p1186) target = $region52
      $region51: #{tpu_custom_call.1} parent=5 // pred_region
        %s1189 = ssub.s32 %s19, 2
        // Predicated region
        $region53: #{tpu_custom_call.1} parent=51 // pred_check
          %p1190 = pneg %p116
        $region54: #{tpu_custom_call.1} parent=51 // pred_check_branch
          %1192 = sbr.rel (%p1190) target = $region56
        $region55: #{tpu_custom_call.1} parent=51 // pred_region
          %p1193 = scmp.lt.s32.totalorder %s25, 1
          %s1194 = scalar_select %p1193, %s25, 1
          %s1195 = smul.addr %s1194, 8
          %s1196 = smul.addr %s1195, 8
          %s1197 = scalar_lea.vmem %s3, %s1196
        $region56: #{tpu_custom_call.1} parent=51 // pred_fallthru
          _
        // Predicated region
        $region57: #{tpu_custom_call.1} parent=51 // pred_check
          %p1198 = pneg %p142
        $region58: #{tpu_custom_call.1} parent=51 // pred_check_branch
          %1200 = sbr.rel (%p1198) target = $region60
        $region59: #{tpu_custom_call.1} parent=51 // pred_region
          %p1201 = scmp.lt.s32.totalorder %s25, 1
          %s1202 = scalar_select %p1201, %s25, 1
          %s1203 = smul.addr %s1202, 8
          %s1204 = smul.addr %s1203, 8
          %s1205 = scalar_lea.vmem %s4, %s1204
        $region60: #{tpu_custom_call.1} parent=51 // pred_fallthru
          _
        // Predicated region
        $region61: #{tpu_custom_call.1} parent=51 // pred_check
          %p1206 = pneg %p168
        $region62: #{tpu_custom_call.1} parent=51 // pred_check_branch
          %1208 = sbr.rel (%p1206) target = $region64
        $region63: #{tpu_custom_call.1} parent=51 // pred_region
          %s1209 = sand.u32 %s153, 1
          %s1210 = scalar_lea.sflag [#allocation4], %s1209
          %s1211 = sand.u32 %s153, 1
          %s1212 = smul.addr %s1211, 2
          %s1213 = scalar_lea.vmem [#allocation3], %s1212
          %1214 = dma.done %s1210, 32
        $region64: #{tpu_custom_call.1} parent=51 // pred_fallthru
          _
        // Predicated region
        $region65: #{tpu_custom_call.1} parent=51 // pred_check
          %p1215 = pneg %p194
        $region66: #{tpu_custom_call.1} parent=51 // pred_check_branch
          %1217 = sbr.rel (%p1215) target = $region68
        $region67: #{tpu_custom_call.1} parent=51 // pred_region
          %s1218 = sand.u32 %s179, 1
          %s1219 = scalar_lea.sflag [#allocation6], %s1218
          %s1220 = sand.u32 %s179, 1
          %s1221 = smul.addr %s1220, 2
          %s1222 = scalar_lea.vmem [#allocation5], %s1221
          %1223 = dma.done %s1219, 32
        $region68: #{tpu_custom_call.1} parent=51 // pred_fallthru
          _
      $region52: #{tpu_custom_call.1} parent=5 // pred_fallthru
        _
    $region6: #{tpu_custom_call.1} parent=1 // loop_footer
      %s23 = sadd.s32 1, %s19
    $region7: #{tpu_custom_call.1} parent=1 // loop_footer_branch
      %18 = sbr.rel target = $region3
    $region8: #{tpu_custom_call.1} parent=1 // loop_exit
      _
    %1224 = vsyncpa [#allocation4], 1
    %s1225 = scalar_lea.sflag [#allocation4], 1
    %1226 = vsyncpa %s1225, 1
    %1227 = vsyncpa [#allocation6], 1
    %s1228 = scalar_lea.sflag [#allocation6], 1
    %1229 = vsyncpa %s1228, 1

</llo_original>
